<compile_context>
chip_gen: v5e
topology: v5e:2x2
jax: 0.10.0
libtpu: 0.0.40
codegen_flags: <defaults>
</compile_context>

<pallas_src>
import functools
import math

import jax
import jax.numpy as jnp
from jax.experimental import pallas as pl
from jax.experimental.pallas import tpu as pltpu

LANE = 128
MXU_DTYPE = jnp.bfloat16          # matmul operand storage; accumulation is f32
_VMEM_CAP = 48 * 1024 * 1024      # safe scoped-VMEM cap on v5e/v6e/v7x


def _round_up(x, m):
    return (x + m - 1) // m * m


def _vmem_limit(per_step_block_bytes):
    # double-buffered pipeline blocks + headroom for in-kernel intermediates
    return int(min(_VMEM_CAP, 2 * per_step_block_bytes + (16 << 20)))


# ----------------------------------------------------------------------------
# In-kernel helpers
# ----------------------------------------------------------------------------
def _masked_layer_norm(h, gamma, beta, mask_f, inv_n, eps=1e-5):
    """LayerNorm over the (lane-padded) last axis.

    Subtract-mean-first formulation (numerically robust).  `mask_f` is 1.0 on
    the real lanes and 0.0 on padded lanes, so padded lanes neither pollute the
    variance nor leave the zero state (gamma/beta are also 0 there).
    """
    mu = jnp.sum(h, axis=-1, keepdims=True) * inv_n
    centered = (h - mu) * mask_f
    var = jnp.sum(centered * centered, axis=-1, keepdims=True) * inv_n
    return centered * jax.lax.rsqrt(var + eps) * gamma + beta


# ----------------------------------------------------------------------------
# Kernel 1: decoder stack, one grid step per layer, activations VMEM-resident
# ----------------------------------------------------------------------------
def decoder_layer_kernel(
    x_ref,                                   # (B*S, Ep) f32   (same block, all steps)
    wq_ref, wk_ref, wv_ref,                  # (Ep, H*Dp) bf16 (this layer)
    wo_ref,                                  # (H*Dp, Ep) bf16
    ln1g_ref, ln1b_ref,                      # (1, Ep) f32
    w1_ref, b1_ref,                          # (Ep, Fp) bf16, (1, Fp) f32
    w2_ref, b2_ref,                          # (Fp, Ep) bf16, (1, Ep) f32
    ln3g_ref, ln3b_ref,                      # (1, Ep) f32
    h_ref,                                   # (B*S, Ep) f32 output (final hidden)
    x_vmem,                                  # (B*S, Ep) f32 scratch, persists over layers
    *,
    batch: int,
    seq: int,
    num_heads: int,
    head_dim: int,      # real (unpadded) head dim -> softmax scale
    head_dim_p: int,    # lane-padded head dim (multiple of 128)
    emb_dim: int,       # real (unpadded) embedding dim -> LayerNorm stats
):
    B, S, H, Dp = batch, seq, num_heads, head_dim_p
    BS = B * S
    Ep = x_vmem.shape[-1]
    layer = pl.program_id(0)
    scale = 1.0 / math.sqrt(float(head_dim))
    inv_e = 1.0 / float(emb_dim)

    # Load the embedded+position-encoded input once; afterwards the residual
    # stream lives in the persistent VMEM scratch (no HBM round trips).
    @pl.when(layer == 0)
    def _():
        x_vmem[...] = x_ref[...]

    x = x_vmem[...]                                               # (BS, Ep) f32
    mask_f = (jax.lax.broadcasted_iota(jnp.int32, (1, Ep), 1)
              < emb_dim).astype(jnp.float32)

    # ---- multi-head self-attention (mask=None in the reference) ----
    xb = x.astype(MXU_DTYPE)
    q = jnp.dot(xb, wq_ref[...], preferred_element_type=jnp.float32) * scale
    k = jnp.dot(xb, wk_ref[...], preferred_element_type=jnp.float32)
    v = jnp.dot(xb, wv_ref[...], preferred_element_type=jnp.float32)

    head_outs = []
    for h in range(H):                       # static unroll; slices are 128-lane aligned
        sl = slice(h * Dp, (h + 1) * Dp)
        qh = q[:, sl].reshape(B, S, Dp).astype(MXU_DTYPE)
        kh = k[:, sl].reshape(B, S, Dp).astype(MXU_DTYPE)
        vh = v[:, sl].reshape(B, S, Dp).astype(MXU_DTYPE)
        s = jnp.einsum("bqd,bkd->bqk", qh, kh,
                       preferred_element_type=jnp.float32)        # (B, S, S)
        s = s - jnp.max(s, axis=-1, keepdims=True)
        p = jnp.exp(s)
        p = p * pl.reciprocal(jnp.sum(p, axis=-1, keepdims=True), approx=True)
        a = jnp.einsum("bqk,bkd->bqd", p.astype(MXU_DTYPE), vh,
                       preferred_element_type=jnp.float32)        # (B, S, Dp)
        head_outs.append(a.reshape(BS, Dp))
    att = jnp.concatenate(head_outs, axis=-1)                     # (BS, H*Dp) lane-aligned
    attn_out = jnp.dot(att.astype(MXU_DTYPE), wo_ref[...],
                       preferred_element_type=jnp.float32)        # (BS, Ep)

    # ---- residual + LayerNorm 1 ----
    h1 = _masked_layer_norm(attn_out + x, ln1g_ref[...], ln1b_ref[...],
                            mask_f, inv_e)

    # (cross-attention + norm2 skipped: encoder_outputs is None in the spec)

    # ---- position-wise FFN: Linear -> ReLU -> Linear ----
    f = jnp.dot(h1.astype(MXU_DTYPE), w1_ref[...],
                preferred_element_type=jnp.float32) + b1_ref[...]
    f = jnp.maximum(f, 0.0)
    f = jnp.dot(f.astype(MXU_DTYPE), w2_ref[...],
                preferred_element_type=jnp.float32) + b2_ref[...]

    # ---- residual + LayerNorm 3 ----
    x_new = _masked_layer_norm(f + h1, ln3g_ref[...], ln3b_ref[...],
                               mask_f, inv_e)
    x_vmem[...] = x_new

    @pl.when(layer == pl.num_programs(0) - 1)
    def _():
        h_ref[...] = x_new


# ----------------------------------------------------------------------------
# Kernel 2: final vocab projection, tiled over the vocab axis ('parallel')
# ----------------------------------------------------------------------------
def vocab_proj_kernel(h_ref, w_ref, b_ref, o_ref):
    hb = h_ref[...].astype(w_ref.dtype)
    o_ref[...] = (jnp.dot(hb, w_ref[...], preferred_element_type=jnp.float32)
                  + b_ref[...])


# ----------------------------------------------------------------------------
# Wrapper: embedding + positional encoding glue, two pallas_calls
# ----------------------------------------------------------------------------
def transformer_apply(token_ids, params, *, num_heads, emb_dim, vocab_size):
    B, S = token_ids.shape
    E = emb_dim
    Dh = E // num_heads
    BS = B * S

    wq = params["wq"]                               # (L, Ep, H*Dp) bf16
    L, Ep, HDp = wq.shape
    Dp = HDp // num_heads
    Fp = params["w1"].shape[-1]
    Vp = params["w_out"].shape[-1]

    # InputEmbedding gather + PositionalEncoding add + lane padding (plain-JAX
    # glue under jit).  Dropout layers are identity (eval mode).
    # TODO(synk): training-mode stochastic dropout is not reproduced.
    x = jnp.take(params["emb"], token_ids, axis=0) + params["pe"][:S][None, :, :]
    x = x.reshape(BS, E).astype(jnp.float32)
    x = jnp.pad(x, ((0, 0), (0, Ep - E)))            # (BS, Ep), padded lanes = 0

    layer_kernel = functools.partial(
        decoder_layer_kernel,
        batch=B, seq=S, num_heads=num_heads,
        head_dim=Dh, head_dim_p=Dp, emb_dim=E,
    )

    # per-step block footprint of the layer grid (for the scoped-VMEM limit)
    weight_keys = ("wq", "wk", "wv", "wo", "ln1g", "ln1b",
                   "w1", "b1", "w2", "b2", "ln3g", "ln3b")
    per_layer_bytes = sum(
        int(params[k].size) * params[k].dtype.itemsize // L for k in weight_keys)
    stack_block_bytes = per_layer_bytes + 3 * BS * Ep * 4   # + x, out, scratch

    hidden = pl.pallas_call(
        layer_kernel,
        out_shape=jax.ShapeDtypeStruct((BS, Ep), jnp.float32),
        grid_spec=pltpu.PrefetchScalarGridSpec(
            num_scalar_prefetch=0,
            grid=(L,),
            in_specs=[
                pl.BlockSpec((BS, Ep), lambda l: (0, 0)),            # x (constant block)
                pl.BlockSpec((None, Ep, HDp), lambda l: (l, 0, 0)),  # wq
                pl.BlockSpec((None, Ep, HDp), lambda l: (l, 0, 0)),  # wk
                pl.BlockSpec((None, Ep, HDp), lambda l: (l, 0, 0)),  # wv
                pl.BlockSpec((None, HDp, Ep), lambda l: (l, 0, 0)),  # wo
                pl.BlockSpec((None, 1, Ep), lambda l: (l, 0, 0)),    # ln1 gamma
                pl.BlockSpec((None, 1, Ep), lambda l: (l, 0, 0)),    # ln1 beta
                pl.BlockSpec((None, Ep, Fp), lambda l: (l, 0, 0)),   # w1
                pl.BlockSpec((None, 1, Fp), lambda l: (l, 0, 0)),    # b1
                pl.BlockSpec((None, Fp, Ep), lambda l: (l, 0, 0)),   # w2
                pl.BlockSpec((None, 1, Ep), lambda l: (l, 0, 0)),    # b2
                pl.BlockSpec((None, 1, Ep), lambda l: (l, 0, 0)),    # ln3 gamma
                pl.BlockSpec((None, 1, Ep), lambda l: (l, 0, 0)),    # ln3 beta
            ],
            out_specs=pl.BlockSpec((BS, Ep), lambda l: (0, 0)),
            scratch_shapes=[pltpu.VMEM((BS, Ep), jnp.float32)],
        ),
        compiler_params=pltpu.CompilerParams(
            dimension_semantics=("arbitrary",),
            vmem_limit_bytes=_vmem_limit(stack_block_bytes),
        ),
    )(x, wq, params["wk"], params["wv"], params["wo"],
      params["ln1g"], params["ln1b"],
      params["w1"], params["b1"], params["w2"], params["b2"],
      params["ln3g"], params["ln3b"])

    # ---- vocab projection, tiled & parallel over the (lane-padded) vocab ----
    TN = 128
    for cand in (512, 256, 128):
        if Vp % cand == 0:
            TN = cand
            break
    proj_block_bytes = BS * Ep * 4 + Ep * TN * 2 + TN * 4 + BS * TN * 4

    logits_padded = pl.pallas_call(
        vocab_proj_kernel,
        out_shape=jax.ShapeDtypeStruct((BS, Vp), jnp.float32),
        grid_spec=pltpu.PrefetchScalarGridSpec(
            num_scalar_prefetch=0,
            grid=(Vp // TN,),
            in_specs=[
                pl.BlockSpec((BS, Ep), lambda j: (0, 0)),
                pl.BlockSpec((Ep, TN), lambda j: (0, j)),
                pl.BlockSpec((1, TN), lambda j: (0, j)),
            ],
            out_specs=pl.BlockSpec((BS, TN), lambda j: (0, j)),
        ),
        compiler_params=pltpu.CompilerParams(
            dimension_semantics=("parallel",),
            vmem_limit_bytes=_vmem_limit(proj_block_bytes),
        ),
    )(hidden, params["w_out"], params["b_out"])

    # strip lane padding of the vocab axis and restore (B, S, V)
    return logits_padded[:, :vocab_size].reshape(B, S, vocab_size)


transformer_forward = jax.jit(
    transformer_apply, static_argnames=("num_heads", "emb_dim", "vocab_size")
)


# ----------------------------------------------------------------------------
# Parameter construction (deterministic; mimics nn.Module __init__ shapes,
# stored pre-transposed (in, out) and zero-padded to lane-dense layouts)
# ----------------------------------------------------------------------------
def make_positional_encoding(embedding_dim, max_sequence_length):
    # Reproduces the (idiosyncratic) PyTorch loop exactly:
    #   for i in range(0, embedding_dim, 2):
    #     pe[pos, i]     = sin(pos / 10000 ** (2 * i / d))
    #     pe[pos, i + 1] = cos(pos / 10000 ** (2 * i / d))
    assert embedding_dim % 2 == 0, "PyTorch loop requires an even embedding_dim"
    pos = jnp.arange(max_sequence_length, dtype=jnp.float32)[:, None]
    i_vals = jnp.arange(0, embedding_dim, 2, dtype=jnp.float32)[None, :]
    angle = pos / jnp.power(10000.0, 2.0 * i_vals / float(embedding_dim))
    pe = jnp.zeros((max_sequence_length, embedding_dim), dtype=jnp.float32)
    pe = pe.at[:, 0::2].set(jnp.sin(angle))
    pe = pe.at[:, 1::2].set(jnp.cos(angle))
    return pe


def init_params(key, *, vocab_size, embedding_dim, max_sequence_length,
                ff_dim, num_heads, num_layers):
    E, H = embedding_dim, num_heads
    Dh = E // H
    Ep = _round_up(E, LANE)
    Dp = _round_up(Dh, LANE)
    Fp = _round_up(ff_dim, LANE)
    Vp = _round_up(vocab_size, LANE)

    def linear_w(k, fan_in, fan_out):
        bound = 1.0 / math.sqrt(float(fan_in))
        # stored as (in, out): already transposed relative to nn.Linear.weight
        return jax.random.uniform(k, (fan_in, fan_out), minval=-bound,
                                  maxval=bound, dtype=jnp.float32)

    def linear_b(k, fan_in, fan_out):
        bound = 1.0 / math.sqrt(float(fan_in))
        return jax.random.uniform(k, (1, fan_out), minval=-bound,
                                  maxval=bound, dtype=jnp.float32)

    def pad2(w, rows, cols, dtype):          # zero-pad a 2-D tensor
        out = jnp.zeros((rows, cols), jnp.float32)
        out = out.at[:w.shape[0], :w.shape[1]].set(w)
        return out.astype(dtype)

    def pad_qkv(w):    # (E, E) -> (Ep, H*Dp), output cols head-blocked & padded
        wh = w.reshape(E, H, Dh)
        out = jnp.zeros((Ep, H, Dp), jnp.float32)
        out = out.at[:E, :, :Dh].set(wh)
        return out.reshape(Ep, H * Dp).astype(MXU_DTYPE)

    def pad_wo(w):     # (E, E) -> (H*Dp, Ep), input rows head-blocked & padded
        wh = w.reshape(H, Dh, E)
        out = jnp.zeros((H, Dp, Ep), jnp.float32)
        out = out.at[:, :Dh, :E].set(wh)
        return out.reshape(H * Dp, Ep).astype(MXU_DTYPE)

    k_emb, k_layers, k_out = jax.random.split(key, 3)
    emb = jax.random.normal(k_emb, (vocab_size, E), jnp.float32)

    wq, wk, wv, wo, w1, b1, w2, b2 = ([] for _ in range(8))
    ln1g, ln1b, ln3g, ln3b = ([] for _ in range(4))
    for lk in jax.random.split(k_layers, num_layers):
        ks = jax.random.split(lk, 8)
        wq.append(pad_qkv(linear_w(ks[0], E, E)))
        wk.append(pad_qkv(linear_w(ks[1], E, E)))
        wv.append(pad_qkv(linear_w(ks[2], E, E)))
        wo.append(pad_wo(linear_w(ks[3], E, E)))
        w1.append(pad2(linear_w(ks[4], E, ff_dim), Ep, Fp, MXU_DTYPE))
        b1.append(pad2(linear_b(ks[5], E, ff_dim), 1, Fp, jnp.float32))
        w2.append(pad2(linear_w(ks[6], ff_dim, E), Fp, Ep, MXU_DTYPE))
        b2.append(pad2(linear_b(ks[7], ff_dim, E), 1, Ep, jnp.float32))
        # LayerNorm affine: gamma=1 / beta=0 on real lanes, ZERO on padded
        # lanes so the padding stays exactly zero through the residual stream.
        g = jnp.zeros((1, Ep), jnp.float32).at[:, :E].set(1.0)
        ln1g.append(g)
        ln1b.append(jnp.zeros((1, Ep), jnp.float32))
        ln3g.append(g)
        ln3b.append(jnp.zeros((1, Ep), jnp.float32))

    ko_w, ko_b = jax.random.split(k_out)
    w_out = pad2(linear_w(ko_w, E, vocab_size), Ep, Vp, MXU_DTYPE)
    b_out = pad2(linear_b(ko_b, E, vocab_size), 1, Vp, jnp.float32)

    return {
        "emb": emb,
        "pe": make_positional_encoding(E, max_sequence_length),
        "wq": jnp.stack(wq), "wk": jnp.stack(wk),
        "wv": jnp.stack(wv), "wo": jnp.stack(wo),
        "ln1g": jnp.stack(ln1g), "ln1b": jnp.stack(ln1b),
        "w1": jnp.stack(w1), "b1": jnp.stack(b1),
        "w2": jnp.stack(w2), "b2": jnp.stack(b2),
        "ln3g": jnp.stack(ln3g), "ln3b": jnp.stack(ln3b),
        "w_out": w_out, "b_out": b_out,
    }


# ----------------------------------------------------------------------------
if __name__ == "__main__":
    vocab_size = 50
    embedding_dim = 32
    max_sequence_length = 16
    num_heads = 4
    ff_dim = 64
    num_layers = 2

    batch = 2
    seq = 8

    key = jax.random.PRNGKey(0)
    k_tok, k_params = jax.random.split(key)

    token_ids = jax.random.randint(k_tok, (batch, seq), 0, vocab_size,
                                   dtype=jnp.int32)
    params = init_params(
        k_params,
        vocab_size=vocab_size,
        embedding_dim=embedding_dim,
        max_sequence_length=max_sequence_length,
        ff_dim=ff_dim,
        num_heads=num_heads,
        num_layers=num_layers,
    )

    out = transformer_forward(
        token_ids, params,
        num_heads=num_heads, emb_dim=embedding_dim, vocab_size=vocab_size,
    )
    out = jax.block_until_ready(out)
    assert out.shape == (batch, seq, vocab_size)
    assert bool(jnp.all(jnp.isfinite(out)))
    print("KERNEL_OK")
</pallas_src>

<mosaic_0001>
module attributes {stable_mosaic.version = 11 : i64} {
  func.func @vocab_proj_kernel(%arg0: i32, %arg1: memref<16x128xf32, #tpu.memory_space<vmem>>, %arg2: memref<128x128xbf16, #tpu.memory_space<vmem>>, %arg3: memref<1x128xf32, #tpu.memory_space<vmem>>, %arg4: memref<16x128xf32, #tpu.memory_space<vmem>>) attributes {dimension_semantics = [#tpu.dimension_semantics<parallel>], iteration_bounds = array<i64: 1>, scalar_prefetch = 0 : i64, scratch_operands = 0 : i64, tpu.core_type = #tpu.core_type<tc>, window_params = [{pipeline_mode = #tpu.pipeline_mode<synchronous>, transform_indices = @transform_0, window_bounds = array<i64: 16, 128>}, {transform_indices = @transform_1, window_bounds = array<i64: 128, 128>}, {transform_indices = @transform_2, window_bounds = array<i64: 1, 128>}, {transform_indices = @transform_3, window_bounds = array<i64: 16, 128>}]} {
    %c0 = arith.constant 0 : index
    %c0_0 = arith.constant 0 : index
    %0 = vector.load %arg1[%c0, %c0_0] : memref<16x128xf32, #tpu.memory_space<vmem>>, vector<16x128xf32>
    %1 = arith.truncf %0 : vector<16x128xf32> to vector<16x128xbf16>
    %c0_1 = arith.constant 0 : index
    %c0_2 = arith.constant 0 : index
    %2 = vector.load %arg2[%c0_1, %c0_2] : memref<128x128xbf16, #tpu.memory_space<vmem>>, vector<128x128xbf16>
    %cst = arith.constant dense<0.000000e+00> : vector<16x128xf32>
    %3 = tpu.matmul %1, %2, %cst {dimension_numbers = #tpu.dot_dimension_numbers<[1], [0], [0], [1], [0, 0, 1, 1], [], []>} : vector<16x128xbf16>, vector<128x128xbf16>, vector<16x128xf32> -> vector<16x128xf32>
    %c0_3 = arith.constant 0 : index
    %c0_4 = arith.constant 0 : index
    %4 = vector.load %arg3[%c0_3, %c0_4] : memref<1x128xf32, #tpu.memory_space<vmem>>, vector<1x128xf32>
    %5 = vector.broadcast %4 : vector<1x128xf32> to vector<16x128xf32>
    %6 = arith.addf %3, %5 : vector<16x128xf32>
    %c0_5 = arith.constant 0 : index
    %c0_6 = arith.constant 0 : index
    %7 = vector.load %arg4[%c0_5, %c0_6] : memref<16x128xf32, #tpu.memory_space<vmem>>, vector<16x128xf32>
    tpu.vector_store %arg4[%c0_5, %c0_6], %6 {strides = array<i32>} : memref<16x128xf32, #tpu.memory_space<vmem>>, vector<16x128xf32>,
    return
  }
  func.func @transform_0(%arg0: i32) -> (i32, i32) {
    %c0_i32 = arith.constant 0 : i32
    %c0_i32_0 = arith.constant 0 : i32
    %c0_i32_1 = arith.constant 0 : i32
    return %c0_i32, %c0_i32_0 : i32, i32
  }
  func.func @transform_1(%arg0: i32) -> (i32, i32) {
    %c0_i32 = arith.constant 0 : i32
    %c0_i32_0 = arith.constant 0 : i32
    return %c0_i32, %arg0 : i32, i32
  }
  func.func @transform_2(%arg0: i32) -> (i32, i32) {
    %c0_i32 = arith.constant 0 : i32
    %c0_i32_0 = arith.constant 0 : i32
    return %c0_i32, %arg0 : i32, i32
  }
  func.func @transform_3(%arg0: i32) -> (i32, i32) {
    %c0_i32 = arith.constant 0 : i32
    %c0_i32_0 = arith.constant 0 : i32
    return %c0_i32, %arg0 : i32, i32
  }
}

module attributes {stable_mosaic.version = 11 : i64} {
  func.func @decoder_layer_kernel(%arg0: i32, %arg1: memref<16x128xf32, #tpu.memory_space<vmem>>, %arg2: memref<1x128x512xbf16, #tpu.memory_space<vmem>>, %arg3: memref<1x128x512xbf16, #tpu.memory_space<vmem>>, %arg4: memref<1x128x512xbf16, #tpu.memory_space<vmem>>, %arg5: memref<1x512x128xbf16, #tpu.memory_space<vmem>>, %arg6: memref<1x1x128xf32, #tpu.memory_space<vmem>>, %arg7: memref<1x1x128xf32, #tpu.memory_space<vmem>>, %arg8: memref<1x128x128xbf16, #tpu.memory_space<vmem>>, %arg9: memref<1x1x128xf32, #tpu.memory_space<vmem>>, %arg10: memref<1x128x128xbf16, #tpu.memory_space<vmem>>, %arg11: memref<1x1x128xf32, #tpu.memory_space<vmem>>, %arg12: memref<1x1x128xf32, #tpu.memory_space<vmem>>, %arg13: memref<1x1x128xf32, #tpu.memory_space<vmem>>, %arg14: memref<16x128xf32, #tpu.memory_space<vmem>>, %arg15: memref<16x128xf32, #tpu.memory_space<vmem>>) attributes {dimension_semantics = [#tpu.dimension_semantics<arbitrary>], iteration_bounds = array<i64: 2>, scalar_prefetch = 0 : i64, scratch_operands = 1 : i64, tpu.core_type = #tpu.core_type<tc>, window_params = [{pipeline_mode = #tpu.pipeline_mode<synchronous>, transform_indices = @transform_0, window_bounds = array<i64: 16, 128>}, {transform_indices = @transform_1, window_bounds = array<i64: 1, 128, 512>}, {transform_indices = @transform_2, window_bounds = array<i64: 1, 128, 512>}, {transform_indices = @transform_3, window_bounds = array<i64: 1, 128, 512>}, {transform_indices = @transform_4, window_bounds = array<i64: 1, 512, 128>}, {transform_indices = @transform_5, window_bounds = array<i64: 1, 1, 128>}, {transform_indices = @transform_6, window_bounds = array<i64: 1, 1, 128>}, {transform_indices = @transform_7, window_bounds = array<i64: 1, 128, 128>}, {transform_indices = @transform_8, window_bounds = array<i64: 1, 1, 128>}, {transform_indices = @transform_9, window_bounds = array<i64: 1, 128, 128>}, {transform_indices = @transform_10, window_bounds = array<i64: 1, 1, 128>}, {transform_indices = @transform_11, window_bounds = array<i64: 1, 1, 128>}, {transform_indices = @transform_12, window_bounds = array<i64: 1, 1, 128>}, {pipeline_mode = #tpu.pipeline_mode<synchronous>, transform_indices = @transform_13, window_bounds = array<i64: 16, 128>}]} {
    %c0_i32 = arith.constant 0 : i32
    %0 = arith.cmpi eq, %arg0, %c0_i32 : i32
    %1 = arith.extui %0 : i1 to i32
    %c0_i32_0 = arith.constant 0 : i32
    %2 = arith.cmpi ne, %1, %c0_i32_0 : i32
    scf.if %2 {
      %c0_74 = arith.constant 0 : index
      %c0_75 = arith.constant 0 : index
      %194 = vector.load %arg1[%c0_74, %c0_75] : memref<16x128xf32, #tpu.memory_space<vmem>>, vector<16x128xf32>
      %c0_76 = arith.constant 0 : index
      %c0_77 = arith.constant 0 : index
      %195 = vector.load %arg15[%c0_76, %c0_77] : memref<16x128xf32, #tpu.memory_space<vmem>>, vector<16x128xf32>
      tpu.vector_store %arg15[%c0_76, %c0_77], %194 {strides = array<i32>} : memref<16x128xf32, #tpu.memory_space<vmem>>, vector<16x128xf32>,
    } else {
    }
    %c0 = arith.constant 0 : index
    %c0_1 = arith.constant 0 : index
    %3 = vector.load %arg15[%c0, %c0_1] : memref<16x128xf32, #tpu.memory_space<vmem>>, vector<16x128xf32>
    %4 = tpu.iota {dimensions = array<i32: 1>} : vector<1x128xi32>
    %c32_i32 = arith.constant 32 : i32
    %5 = vector.broadcast %c32_i32 : i32 to vector<1x128xi32>
    %6 = arith.cmpi slt, %4, %5 : vector<1x128xi32>
    %7 = arith.extui %6 : vector<1x128xi1> to vector<1x128xi32>
    %8 = arith.sitofp %7 : vector<1x128xi32> to vector<1x128xf32>
    %9 = arith.truncf %3 : vector<16x128xf32> to vector<16x128xbf16>
    %c0_2 = arith.constant 0 : index
    %c0_3 = arith.constant 0 : index
    %c0_4 = arith.constant 0 : index
    %10 = vector.load %arg2[%c0_2, %c0_3, %c0_4] : memref<1x128x512xbf16, #tpu.memory_space<vmem>>, vector<1x128x512xbf16>
    %11 = vector.shape_cast %10 : vector<1x128x512xbf16> to vector<128x512xbf16>
    %cst = arith.constant dense<0.000000e+00> : vector<16x512xf32>
    %12 = tpu.matmul %9, %11, %cst {dimension_numbers = #tpu.dot_dimension_numbers<[1], [0], [0], [1], [0, 0, 1, 1], [], []>} : vector<16x128xbf16>, vector<128x512xbf16>, vector<16x512xf32> -> vector<16x512xf32>
    %cst_5 = arith.constant 0.353553385 : f32
    %13 = vector.broadcast %cst_5 : f32 to vector<16x512xf32>
    %14 = arith.mulf %12, %13 : vector<16x512xf32>
    %c0_6 = arith.constant 0 : index
    %c0_7 = arith.constant 0 : index
    %c0_8 = arith.constant 0 : index
    %15 = vector.load %arg3[%c0_6, %c0_7, %c0_8] : memref<1x128x512xbf16, #tpu.memory_space<vmem>>, vector<1x128x512xbf16>
    %16 = vector.shape_cast %15 : vector<1x128x512xbf16> to vector<128x512xbf16>
    %cst_9 = arith.constant dense<0.000000e+00> : vector<16x512xf32>
    %17 = tpu.matmul %9, %16, %cst_9 {dimension_numbers = #tpu.dot_dimension_numbers<[1], [0], [0], [1], [0, 0, 1, 1], [], []>} : vector<16x128xbf16>, vector<128x512xbf16>, vector<16x512xf32> -> vector<16x512xf32>
    %c0_10 = arith.constant 0 : index
    %c0_11 = arith.constant 0 : index
    %c0_12 = arith.constant 0 : index
    %18 = vector.load %arg4[%c0_10, %c0_11, %c0_12] : memref<1x128x512xbf16, #tpu.memory_space<vmem>>, vector<1x128x512xbf16>
    %19 = vector.shape_cast %18 : vector<1x128x512xbf16> to vector<128x512xbf16>
    %cst_13 = arith.constant dense<0.000000e+00> : vector<16x512xf32>
    %20 = tpu.matmul %9, %19, %cst_13 {dimension_numbers = #tpu.dot_dimension_numbers<[1], [0], [0], [1], [0, 0, 1, 1], [], []>} : vector<16x128xbf16>, vector<128x512xbf16>, vector<16x512xf32> -> vector<16x512xf32>
    %21 = vector.extract_strided_slice %14 {offsets = [0, 0], sizes = [16, 128], strides = [1, 1]} : vector<16x512xf32> to vector<16x128xf32>
    %22 = vector.shape_cast %21 : vector<16x128xf32> to vector<2x8x128xf32>
    %23 = arith.truncf %22 : vector<2x8x128xf32> to vector<2x8x128xbf16>
    %24 = vector.extract_strided_slice %17 {offsets = [0, 0], sizes = [16, 128], strides = [1, 1]} : vector<16x512xf32> to vector<16x128xf32>
    %25 = vector.shape_cast %24 : vector<16x128xf32> to vector<2x8x128xf32>
    %26 = arith.truncf %25 : vector<2x8x128xf32> to vector<2x8x128xbf16>
    %27 = vector.extract_strided_slice %20 {offsets = [0, 0], sizes = [16, 128], strides = [1, 1]} : vector<16x512xf32> to vector<16x128xf32>
    %28 = vector.shape_cast %27 : vector<16x128xf32> to vector<2x8x128xf32>
    %29 = arith.truncf %28 : vector<2x8x128xf32> to vector<2x8x128xbf16>
    "tpu.trace_start"() <{level = 10 : i32, message = "bqd,bkd->bqk"}> : () -> ()
    %cst_14 = arith.constant dense<0.000000e+00> : vector<2x8x8xf32>
    %30 = tpu.matmul %23, %26, %cst_14 {dimension_numbers = #tpu.dot_dimension_numbers<[2], [2], [1], [1], [0, 0, 0, 1, 1, 1], [0], [0]>} : vector<2x8x128xbf16>, vector<2x8x128xbf16>, vector<2x8x8xf32> -> vector<2x8x8xf32>
    "tpu.trace_stop"() : () -> ()
    %cst_15 = arith.constant dense<0xFF800000> : vector<2x8xf32>
    %31 = vector.multi_reduction <maximumf>, %30, %cst_15 [2] : vector<2x8x8xf32> to vector<2x8xf32>
    %32 = vector.shape_cast %31 : vector<2x8xf32> to vector<2x8x1xf32>
    %33 = vector.broadcast %32 : vector<2x8x1xf32> to vector<2x8x8xf32>
    %34 = arith.subf %30, %33 : vector<2x8x8xf32>
    %35 = math.exp %34 : vector<2x8x8xf32>
    %cst_16 = arith.constant dense<0.000000e+00> : vector<2x8xf32>
    %36 = vector.multi_reduction <add>, %35, %cst_16 [2] : vector<2x8x8xf32> to vector<2x8xf32>
    %37 = vector.shape_cast %36 : vector<2x8xf32> to vector<2x8x1xf32>
    %38 = tpu.reciprocal %37 {approx = true} : vector<2x8x1xf32> -> vector<2x8x1xf32>
    %39 = vector.broadcast %38 : vector<2x8x1xf32> to vector<2x8x8xf32>
    %40 = arith.mulf %35, %39 : vector<2x8x8xf32>
    %41 = arith.truncf %40 : vector<2x8x8xf32> to vector<2x8x8xbf16>
    "tpu.trace_start"() <{level = 10 : i32, message = "bqk,bkd->bqd"}> : () -> ()
    %cst_17 = arith.constant dense<0.000000e+00> : vector<2x8x128xf32>
    %42 = tpu.matmul %41, %29, %cst_17 {dimension_numbers = #tpu.dot_dimension_numbers<[2], [1], [1], [2], [0, 0, 0, 1, 1, 2], [0], [0]>} : vector<2x8x8xbf16>, vector<2x8x128xbf16>, vector<2x8x128xf32> -> vector<2x8x128xf32>
    "tpu.trace_stop"() : () -> ()
    %43 = vector.shape_cast %42 : vector<2x8x128xf32> to vector<16x128xf32>
    %44 = vector.extract_strided_slice %14 {offsets = [0, 128], sizes = [16, 128], strides = [1, 1]} : vector<16x512xf32> to vector<16x128xf32>
    %45 = vector.shape_cast %44 : vector<16x128xf32> to vector<2x8x128xf32>
    %46 = arith.truncf %45 : vector<2x8x128xf32> to vector<2x8x128xbf16>
    %47 = vector.extract_strided_slice %17 {offsets = [0, 128], sizes = [16, 128], strides = [1, 1]} : vector<16x512xf32> to vector<16x128xf32>
    %48 = vector.shape_cast %47 : vector<16x128xf32> to vector<2x8x128xf32>
    %49 = arith.truncf %48 : vector<2x8x128xf32> to vector<2x8x128xbf16>
    %50 = vector.extract_strided_slice %20 {offsets = [0, 128], sizes = [16, 128], strides = [1, 1]} : vector<16x512xf32> to vector<16x128xf32>
    %51 = vector.shape_cast %50 : vector<16x128xf32> to vector<2x8x128xf32>
    %52 = arith.truncf %51 : vector<2x8x128xf32> to vector<2x8x128xbf16>
    "tpu.trace_start"() <{level = 10 : i32, message = "bqd,bkd->bqk"}> : () -> ()
    %cst_18 = arith.constant dense<0.000000e+00> : vector<2x8x8xf32>
    %53 = tpu.matmul %46, %49, %cst_18 {dimension_numbers = #tpu.dot_dimension_numbers<[2], [2], [1], [1], [0, 0, 0, 1, 1, 1], [0], [0]>} : vector<2x8x128xbf16>, vector<2x8x128xbf16>, vector<2x8x8xf32> -> vector<2x8x8xf32>
    "tpu.trace_stop"() : () -> ()
    %cst_19 = arith.constant dense<0xFF800000> : vector<2x8xf32>
    %54 = vector.multi_reduction <maximumf>, %53, %cst_19 [2] : vector<2x8x8xf32> to vector<2x8xf32>
    %55 = vector.shape_cast %54 : vector<2x8xf32> to vector<2x8x1xf32>
    %56 = vector.broadcast %55 : vector<2x8x1xf32> to vector<2x8x8xf32>
    %57 = arith.subf %53, %56 : vector<2x8x8xf32>
    %58 = math.exp %57 : vector<2x8x8xf32>
    %cst_20 = arith.constant dense<0.000000e+00> : vector<2x8xf32>
    %59 = vector.multi_reduction <add>, %58, %cst_20 [2] : vector<2x8x8xf32> to vector<2x8xf32>
    %60 = vector.shape_cast %59 : vector<2x8xf32> to vector<2x8x1xf32>
    %61 = tpu.reciprocal %60 {approx = true} : vector<2x8x1xf32> -> vector<2x8x1xf32>
    %62 = vector.broadcast %61 : vector<2x8x1xf32> to vector<2x8x8xf32>
    %63 = arith.mulf %58, %62 : vector<2x8x8xf32>
    %64 = arith.truncf %63 : vector<2x8x8xf32> to vector<2x8x8xbf16>
    "tpu.trace_start"() <{level = 10 : i32, message = "bqk,bkd->bqd"}> : () -> ()
    %cst_21 = arith.constant dense<0.000000e+00> : vector<2x8x128xf32>
    %65 = tpu.matmul %64, %52, %cst_21 {dimension_numbers = #tpu.dot_dimension_numbers<[2], [1], [1], [2], [0, 0, 0, 1, 1, 2], [0], [0]>} : vector<2x8x8xbf16>, vector<2x8x128xbf16>, vector<2x8x128xf32> -> vector<2x8x128xf32>
    "tpu.trace_stop"() : () -> ()
    %66 = vector.shape_cast %65 : vector<2x8x128xf32> to vector<16x128xf32>
    %67 = vector.extract_strided_slice %14 {offsets = [0, 256], sizes = [16, 128], strides = [1, 1]} : vector<16x512xf32> to vector<16x128xf32>
    %68 = vector.shape_cast %67 : vector<16x128xf32> to vector<2x8x128xf32>
    %69 = arith.truncf %68 : vector<2x8x128xf32> to vector<2x8x128xbf16>
    %70 = vector.extract_strided_slice %17 {offsets = [0, 256], sizes = [16, 128], strides = [1, 1]} : vector<16x512xf32> to vector<16x128xf32>
    %71 = vector.shape_cast %70 : vector<16x128xf32> to vector<2x8x128xf32>
    %72 = arith.truncf %71 : vector<2x8x128xf32> to vector<2x8x128xbf16>
    %73 = vector.extract_strided_slice %20 {offsets = [0, 256], sizes = [16, 128], strides = [1, 1]} : vector<16x512xf32> to vector<16x128xf32>
    %74 = vector.shape_cast %73 : vector<16x128xf32> to vector<2x8x128xf32>
    %75 = arith.truncf %74 : vector<2x8x128xf32> to vector<2x8x128xbf16>
    "tpu.trace_start"() <{level = 10 : i32, message = "bqd,bkd->bqk"}> : () -> ()
    %cst_22 = arith.constant dense<0.000000e+00> : vector<2x8x8xf32>
    %76 = tpu.matmul %69, %72, %cst_22 {dimension_numbers = #tpu.dot_dimension_numbers<[2], [2], [1], [1], [0, 0, 0, 1, 1, 1], [0], [0]>} : vector<2x8x128xbf16>, vector<2x8x128xbf16>, vector<2x8x8xf32> -> vector<2x8x8xf32>
    "tpu.trace_stop"() : () -> ()
    %cst_23 = arith.constant dense<0xFF800000> : vector<2x8xf32>
    %77 = vector.multi_reduction <maximumf>, %76, %cst_23 [2] : vector<2x8x8xf32> to vector<2x8xf32>
    %78 = vector.shape_cast %77 : vector<2x8xf32> to vector<2x8x1xf32>
    %79 = vector.broadcast %78 : vector<2x8x1xf32> to vector<2x8x8xf32>
    %80 = arith.subf %76, %79 : vector<2x8x8xf32>
    %81 = math.exp %80 : vector<2x8x8xf32>
    %cst_24 = arith.constant dense<0.000000e+00> : vector<2x8xf32>
    %82 = vector.multi_reduction <add>, %81, %cst_24 [2] : vector<2x8x8xf32> to vector<2x8xf32>
    %83 = vector.shape_cast %82 : vector<2x8xf32> to vector<2x8x1xf32>
    %84 = tpu.reciprocal %83 {approx = true} : vector<2x8x1xf32> -> vector<2x8x1xf32>
    %85 = vector.broadcast %84 : vector<2x8x1xf32> to vector<2x8x8xf32>
    %86 = arith.mulf %81, %85 : vector<2x8x8xf32>
    %87 = arith.truncf %86 : vector<2x8x8xf32> to vector<2x8x8xbf16>
    "tpu.trace_start"() <{level = 10 : i32, message = "bqk,bkd->bqd"}> : () -> ()
    %cst_25 = arith.constant dense<0.000000e+00> : vector<2x8x128xf32>
    %88 = tpu.matmul %87, %75, %cst_25 {dimension_numbers = #tpu.dot_dimension_numbers<[2], [1], [1], [2], [0, 0, 0, 1, 1, 2], [0], [0]>} : vector<2x8x8xbf16>, vector<2x8x128xbf16>, vector<2x8x128xf32> -> vector<2x8x128xf32>
    "tpu.trace_stop"() : () -> ()
    %89 = vector.shape_cast %88 : vector<2x8x128xf32> to vector<16x128xf32>
    %90 = vector.extract_strided_slice %14 {offsets = [0, 384], sizes = [16, 128], strides = [1, 1]} : vector<16x512xf32> to vector<16x128xf32>
    %91 = vector.shape_cast %90 : vector<16x128xf32> to vector<2x8x128xf32>
    %92 = arith.truncf %91 : vector<2x8x128xf32> to vector<2x8x128xbf16>
    %93 = vector.extract_strided_slice %17 {offsets = [0, 384], sizes = [16, 128], strides = [1, 1]} : vector<16x512xf32> to vector<16x128xf32>
    %94 = vector.shape_cast %93 : vector<16x128xf32> to vector<2x8x128xf32>
    %95 = arith.truncf %94 : vector<2x8x128xf32> to vector<2x8x128xbf16>
    %96 = vector.extract_strided_slice %20 {offsets = [0, 384], sizes = [16, 128], strides = [1, 1]} : vector<16x512xf32> to vector<16x128xf32>
    %97 = vector.shape_cast %96 : vector<16x128xf32> to vector<2x8x128xf32>
    %98 = arith.truncf %97 : vector<2x8x128xf32> to vector<2x8x128xbf16>
    "tpu.trace_start"() <{level = 10 : i32, message = "bqd,bkd->bqk"}> : () -> ()
    %cst_26 = arith.constant dense<0.000000e+00> : vector<2x8x8xf32>
    %99 = tpu.matmul %92, %95, %cst_26 {dimension_numbers = #tpu.dot_dimension_numbers<[2], [2], [1], [1], [0, 0, 0, 1, 1, 1], [0], [0]>} : vector<2x8x128xbf16>, vector<2x8x128xbf16>, vector<2x8x8xf32> -> vector<2x8x8xf32>
    "tpu.trace_stop"() : () -> ()
    %cst_27 = arith.constant dense<0xFF800000> : vector<2x8xf32>
    %100 = vector.multi_reduction <maximumf>, %99, %cst_27 [2] : vector<2x8x8xf32> to vector<2x8xf32>
    %101 = vector.shape_cast %100 : vector<2x8xf32> to vector<2x8x1xf32>
    %102 = vector.broadcast %101 : vector<2x8x1xf32> to vector<2x8x8xf32>
    %103 = arith.subf %99, %102 : vector<2x8x8xf32>
    %104 = math.exp %103 : vector<2x8x8xf32>
    %cst_28 = arith.constant dense<0.000000e+00> : vector<2x8xf32>
    %105 = vector.multi_reduction <add>, %104, %cst_28 [2] : vector<2x8x8xf32> to vector<2x8xf32>
    %106 = vector.shape_cast %105 : vector<2x8xf32> to vector<2x8x1xf32>
    %107 = tpu.reciprocal %106 {approx = true} : vector<2x8x1xf32> -> vector<2x8x1xf32>
    %108 = vector.broadcast %107 : vector<2x8x1xf32> to vector<2x8x8xf32>
    %109 = arith.mulf %104, %108 : vector<2x8x8xf32>
    %110 = arith.truncf %109 : vector<2x8x8xf32> to vector<2x8x8xbf16>
    "tpu.trace_start"() <{level = 10 : i32, message = "bqk,bkd->bqd"}> : () -> ()
    %cst_29 = arith.constant dense<0.000000e+00> : vector<2x8x128xf32>
    %111 = tpu.matmul %110, %98, %cst_29 {dimension_numbers = #tpu.dot_dimension_numbers<[2], [1], [1], [2], [0, 0, 0, 1, 1, 2], [0], [0]>} : vector<2x8x8xbf16>, vector<2x8x128xbf16>, vector<2x8x128xf32> -> vector<2x8x128xf32>
    "tpu.trace_stop"() : () -> ()
    %112 = vector.shape_cast %111 : vector<2x8x128xf32> to vector<16x128xf32>
    %113 = tpu.concatenate %43, %66, %89, %112 in 1 : vector<16x128xf32>, vector<16x128xf32>, vector<16x128xf32>, vector<16x128xf32> -> vector<16x512xf32>
    %114 = arith.truncf %113 : vector<16x512xf32> to vector<16x512xbf16>
    %c0_30 = arith.constant 0 : index
    %c0_31 = arith.constant 0 : index
    %c0_32 = arith.constant 0 : index
    %115 = vector.load %arg5[%c0_30, %c0_31, %c0_32] : memref<1x512x128xbf16, #tpu.memory_space<vmem>>, vector<1x512x128xbf16>
    %116 = vector.shape_cast %115 : vector<1x512x128xbf16> to vector<512x128xbf16>
    %cst_33 = arith.constant dense<0.000000e+00> : vector<16x128xf32>
    %117 = tpu.matmul %114, %116, %cst_33 {dimension_numbers = #tpu.dot_dimension_numbers<[1], [0], [0], [1], [0, 0, 1, 1], [], []>} : vector<16x512xbf16>, vector<512x128xbf16>, vector<16x128xf32> -> vector<16x128xf32>
    %118 = arith.addf %117, %3 : vector<16x128xf32>
    %c0_34 = arith.constant 0 : index
    %c0_35 = arith.constant 0 : index
    %c0_36 = arith.constant 0 : index
    %119 = vector.load %arg6[%c0_34, %c0_35, %c0_36] : memref<1x1x128xf32, #tpu.memory_space<vmem>>, vector<1x1x128xf32>
    %120 = vector.shape_cast %119 : vector<1x1x128xf32> to vector<1x128xf32>
    %c0_37 = arith.constant 0 : index
    %c0_38 = arith.constant 0 : index
    %c0_39 = arith.constant 0 : index
    %121 = vector.load %arg7[%c0_37, %c0_38, %c0_39] : memref<1x1x128xf32, #tpu.memory_space<vmem>>, vector<1x1x128xf32>
    %122 = vector.shape_cast %121 : vector<1x1x128xf32> to vector<1x128xf32>
    %cst_40 = arith.constant dense<0.000000e+00> : vector<16xf32>
    %123 = vector.multi_reduction <add>, %118, %cst_40 [1] : vector<16x128xf32> to vector<16xf32>
    %124 = vector.shape_cast %123 : vector<16xf32> to vector<16x1xf32>
    %cst_41 = arith.constant 3.125000e-02 : f32
    %125 = vector.broadcast %cst_41 : f32 to vector<16x1xf32>
    %126 = arith.mulf %124, %125 : vector<16x1xf32>
    %127 = vector.broadcast %126 : vector<16x1xf32> to vector<16x128xf32>
    %128 = arith.subf %118, %127 : vector<16x128xf32>
    %129 = vector.broadcast %8 : vector<1x128xf32> to vector<16x128xf32>
    %130 = arith.mulf %128, %129 : vector<16x128xf32>
    %131 = arith.mulf %130, %130 : vector<16x128xf32>
    %cst_42 = arith.constant dense<0.000000e+00> : vector<16xf32>
    %132 = vector.multi_reduction <add>, %131, %cst_42 [1] : vector<16x128xf32> to vector<16xf32>
    %133 = vector.shape_cast %132 : vector<16xf32> to vector<16x1xf32>
    %cst_43 = arith.constant 3.125000e-02 : f32
    %134 = vector.broadcast %cst_43 : f32 to vector<16x1xf32>
    %135 = arith.mulf %133, %134 : vector<16x1xf32>
    %cst_44 = arith.constant 9.99999974E-6 : f32
    %136 = vector.broadcast %cst_44 : f32 to vector<16x1xf32>
    %137 = arith.addf %135, %136 : vector<16x1xf32>
    %138 = math.rsqrt %137 : vector<16x1xf32>
    %139 = vector.broadcast %138 : vector<16x1xf32> to vector<16x128xf32>
    %140 = arith.mulf %130, %139 : vector<16x128xf32>
    %141 = vector.broadcast %120 : vector<1x128xf32> to vector<16x128xf32>
    %142 = arith.mulf %140, %141 : vector<16x128xf32>
    %143 = vector.broadcast %122 : vector<1x128xf32> to vector<16x128xf32>
    %144 = arith.addf %142, %143 : vector<16x128xf32>
    %145 = arith.truncf %144 : vector<16x128xf32> to vector<16x128xbf16>
    %c0_45 = arith.constant 0 : index
    %c0_46 = arith.constant 0 : index
    %c0_47 = arith.constant 0 : index
    %146 = vector.load %arg8[%c0_45, %c0_46, %c0_47] : memref<1x128x128xbf16, #tpu.memory_space<vmem>>, vector<1x128x128xbf16>
    %147 = vector.shape_cast %146 : vector<1x128x128xbf16> to vector<128x128xbf16>
    %cst_48 = arith.constant dense<0.000000e+00> : vector<16x128xf32>
    %148 = tpu.matmul %145, %147, %cst_48 {dimension_numbers = #tpu.dot_dimension_numbers<[1], [0], [0], [1], [0, 0, 1, 1], [], []>} : vector<16x128xbf16>, vector<128x128xbf16>, vector<16x128xf32> -> vector<16x128xf32>
    %c0_49 = arith.constant 0 : index
    %c0_50 = arith.constant 0 : index
    %c0_51 = arith.constant 0 : index
    %149 = vector.load %arg9[%c0_49, %c0_50, %c0_51] : memref<1x1x128xf32, #tpu.memory_space<vmem>>, vector<1x1x128xf32>
    %150 = vector.shape_cast %149 : vector<1x1x128xf32> to vector<1x128xf32>
    %151 = vector.broadcast %150 : vector<1x128xf32> to vector<16x128xf32>
    %152 = arith.addf %148, %151 : vector<16x128xf32>
    %cst_52 = arith.constant 0.000000e+00 : f32
    %153 = vector.broadcast %cst_52 : f32 to vector<16x128xf32>
    %154 = arith.maximumf %152, %153 : vector<16x128xf32>
    %155 = arith.truncf %154 : vector<16x128xf32> to vector<16x128xbf16>
    %c0_53 = arith.constant 0 : index
    %c0_54 = arith.constant 0 : index
    %c0_55 = arith.constant 0 : index
    %156 = vector.load %arg10[%c0_53, %c0_54, %c0_55] : memref<1x128x128xbf16, #tpu.memory_space<vmem>>, vector<1x128x128xbf16>
    %157 = vector.shape_cast %156 : vector<1x128x128xbf16> to vector<128x128xbf16>
    %cst_56 = arith.constant dense<0.000000e+00> : vector<16x128xf32>
    %158 = tpu.matmul %155, %157, %cst_56 {dimension_numbers = #tpu.dot_dimension_numbers<[1], [0], [0], [1], [0, 0, 1, 1], [], []>} : vector<16x128xbf16>, vector<128x128xbf16>, vector<16x128xf32> -> vector<16x128xf32>
    %c0_57 = arith.constant 0 : index
    %c0_58 = arith.constant 0 : index
    %c0_59 = arith.constant 0 : index
    %159 = vector.load %arg11[%c0_57, %c0_58, %c0_59] : memref<1x1x128xf32, #tpu.memory_space<vmem>>, vector<1x1x128xf32>
    %160 = vector.shape_cast %159 : vector<1x1x128xf32> to vector<1x128xf32>
    %161 = vector.broadcast %160 : vector<1x128xf32> to vector<16x128xf32>
    %162 = arith.addf %158, %161 : vector<16x128xf32>
    %163 = arith.addf %162, %144 : vector<16x128xf32>
    %c0_60 = arith.constant 0 : index
    %c0_61 = arith.constant 0 : index
    %c0_62 = arith.constant 0 : index
    %164 = vector.load %arg12[%c0_60, %c0_61, %c0_62] : memref<1x1x128xf32, #tpu.memory_space<vmem>>, vector<1x1x128xf32>
    %165 = vector.shape_cast %164 : vector<1x1x128xf32> to vector<1x128xf32>
    %c0_63 = arith.constant 0 : index
    %c0_64 = arith.constant 0 : index
    %c0_65 = arith.constant 0 : index
    %166 = vector.load %arg13[%c0_63, %c0_64, %c0_65] : memref<1x1x128xf32, #tpu.memory_space<vmem>>, vector<1x1x128xf32>
    %167 = vector.shape_cast %166 : vector<1x1x128xf32> to vector<1x128xf32>
    %cst_66 = arith.constant dense<0.000000e+00> : vector<16xf32>
    %168 = vector.multi_reduction <add>, %163, %cst_66 [1] : vector<16x128xf32> to vector<16xf32>
    %169 = vector.shape_cast %168 : vector<16xf32> to vector<16x1xf32>
    %cst_67 = arith.constant 3.125000e-02 : f32
    %170 = vector.broadcast %cst_67 : f32 to vector<16x1xf32>
    %171 = arith.mulf %169, %170 : vector<16x1xf32>
    %172 = vector.broadcast %171 : vector<16x1xf32> to vector<16x128xf32>
    %173 = arith.subf %163, %172 : vector<16x128xf32>
    %174 = vector.broadcast %8 : vector<1x128xf32> to vector<16x128xf32>
    %175 = arith.mulf %173, %174 : vector<16x128xf32>
    %176 = arith.mulf %175, %175 : vector<16x128xf32>
    %cst_68 = arith.constant dense<0.000000e+00> : vector<16xf32>
    %177 = vector.multi_reduction <add>, %176, %cst_68 [1] : vector<16x128xf32> to vector<16xf32>
    %178 = vector.shape_cast %177 : vector<16xf32> to vector<16x1xf32>
    %cst_69 = arith.constant 3.125000e-02 : f32
    %179 = vector.broadcast %cst_69 : f32 to vector<16x1xf32>
    %180 = arith.mulf %178, %179 : vector<16x1xf32>
    %cst_70 = arith.constant 9.99999974E-6 : f32
    %181 = vector.broadcast %cst_70 : f32 to vector<16x1xf32>
    %182 = arith.addf %180, %181 : vector<16x1xf32>
    %183 = math.rsqrt %182 : vector<16x1xf32>
    %184 = vector.broadcast %183 : vector<16x1xf32> to vector<16x128xf32>
    %185 = arith.mulf %175, %184 : vector<16x128xf32>
    %186 = vector.broadcast %165 : vector<1x128xf32> to vector<16x128xf32>
    %187 = arith.mulf %185, %186 : vector<16x128xf32>
    %188 = vector.broadcast %167 : vector<1x128xf32> to vector<16x128xf32>
    %189 = arith.addf %187, %188 : vector<16x128xf32>
    %c0_71 = arith.constant 0 : index
    %c0_72 = arith.constant 0 : index
    %190 = vector.load %arg15[%c0_71, %c0_72] : memref<16x128xf32, #tpu.memory_space<vmem>>, vector<16x128xf32>
    tpu.vector_store %arg15[%c0_71, %c0_72], %189 {strides = array<i32>} : memref<16x128xf32, #tpu.memory_space<vmem>>, vector<16x128xf32>,
    %c1_i32 = arith.constant 1 : i32
    %191 = arith.cmpi eq, %arg0, %c1_i32 : i32
    %192 = arith.extui %191 : i1 to i32
    %c0_i32_73 = arith.constant 0 : i32
    %193 = arith.cmpi ne, %192, %c0_i32_73 : i32
    scf.if %193 {
      %c0_74 = arith.constant 0 : index
      %c0_75 = arith.constant 0 : index
      %194 = vector.load %arg14[%c0_74, %c0_75] : memref<16x128xf32, #tpu.memory_space<vmem>>, vector<16x128xf32>
      tpu.vector_store %arg14[%c0_74, %c0_75], %189 {strides = array<i32>} : memref<16x128xf32, #tpu.memory_space<vmem>>, vector<16x128xf32>,
    } else {
    }
    return
  }
  func.func @transform_0(%arg0: i32) -> (i32, i32) {
    %c0_i32 = arith.constant 0 : i32
    %c0_i32_0 = arith.constant 0 : i32
    %c0_i32_1 = arith.constant 0 : i32
    return %c0_i32, %c0_i32_0 : i32, i32
  }
  func.func @transform_1(%arg0: i32) -> (i32, i32, i32) {
    %c0_i32 = arith.constant 0 : i32
    %c0_i32_0 = arith.constant 0 : i32
    %c0_i32_1 = arith.constant 0 : i32
    return %arg0, %c0_i32, %c0_i32_0 : i32, i32, i32
  }
  func.func @transform_2(%arg0: i32) -> (i32, i32, i32) {
    %c0_i32 = arith.constant 0 : i32
    %c0_i32_0 = arith.constant 0 : i32
    %c0_i32_1 = arith.constant 0 : i32
    return %arg0, %c0_i32, %c0_i32_0 : i32, i32, i32
  }
  func.func @transform_3(%arg0: i32) -> (i32, i32, i32) {
    %c0_i32 = arith.constant 0 : i32
    %c0_i32_0 = arith.constant 0 : i32
    %c0_i32_1 = arith.constant 0 : i32
    return %arg0, %c0_i32, %c0_i32_0 : i32, i32, i32
  }
  func.func @transform_4(%arg0: i32) -> (i32, i32, i32) {
    %c0_i32 = arith.constant 0 : i32
    %c0_i32_0 = arith.constant 0 : i32
    %c0_i32_1 = arith.constant 0 : i32
    return %arg0, %c0_i32, %c0_i32_0 : i32, i32, i32
  }
  func.func @transform_5(%arg0: i32) -> (i32, i32, i32) {
    %c0_i32 = arith.constant 0 : i32
    %c0_i32_0 = arith.constant 0 : i32
    %c0_i32_1 = arith.constant 0 : i32
    return %arg0, %c0_i32, %c0_i32_0 : i32, i32, i32
  }
  func.func @transform_6(%arg0: i32) -> (i32, i32, i32) {
    %c0_i32 = arith.constant 0 : i32
    %c0_i32_0 = arith.constant 0 : i32
    %c0_i32_1 = arith.constant 0 : i32
    return %arg0, %c0_i32, %c0_i32_0 : i32, i32, i32
  }
  func.func @transform_7(%arg0: i32) -> (i32, i32, i32) {
    %c0_i32 = arith.constant 0 : i32
    %c0_i32_0 = arith.constant 0 : i32
    %c0_i32_1 = arith.constant 0 : i32
    return %arg0, %c0_i32, %c0_i32_0 : i32, i32, i32
  }
  func.func @transform_8(%arg0: i32) -> (i32, i32, i32) {
    %c0_i32 = arith.constant 0 : i32
    %c0_i32_0 = arith.constant 0 : i32
    %c0_i32_1 = arith.constant 0 : i32
    return %arg0, %c0_i32, %c0_i32_0 : i32, i32, i32
  }
  func.func @transform_9(%arg0: i32) -> (i32, i32, i32) {
    %c0_i32 = arith.constant 0 : i32
    %c0_i32_0 = arith.constant 0 : i32
    %c0_i32_1 = arith.constant 0 : i32
    return %arg0, %c0_i32, %c0_i32_0 : i32, i32, i32
  }
  func.func @transform_10(%arg0: i32) -> (i32, i32, i32) {
    %c0_i32 = arith.constant 0 : i32
    %c0_i32_0 = arith.constant 0 : i32
    %c0_i32_1 = arith.constant 0 : i32
    return %arg0, %c0_i32, %c0_i32_0 : i32, i32, i32
  }
  func.func @transform_11(%arg0: i32) -> (i32, i32, i32) {
    %c0_i32 = arith.constant 0 : i32
    %c0_i32_0 = arith.constant 0 : i32
    %c0_i32_1 = arith.constant 0 : i32
    return %arg0, %c0_i32, %c0_i32_0 : i32, i32, i32
  }
  func.func @transform_12(%arg0: i32) -> (i32, i32, i32) {
    %c0_i32 = arith.constant 0 : i32
    %c0_i32_0 = arith.constant 0 : i32
    %c0_i32_1 = arith.constant 0 : i32
    return %arg0, %c0_i32, %c0_i32_0 : i32, i32, i32
  }
  func.func @transform_13(%arg0: i32) -> (i32, i32) {
    %c0_i32 = arith.constant 0 : i32
    %c0_i32_0 = arith.constant 0 : i32
    %c0_i32_1 = arith.constant 0 : i32
    return %c0_i32, %c0_i32_0 : i32, i32
  }
}

</mosaic_0001>

<llo_original>
// kernel: transformer_apply.3
$region0: #{transformer_apply.3}
  #allocation0 [shape = 'u32[]', space=smem, size = 0x4, offset = 0x4, fixed_abs, tag = 'smem constant byte address 0x4 - core index']
  #allocation1 [shape = 'u32[72,128]{1,0:T(1,128)}', space=vmem, size = 0x9000, scoped, tag = 'internal scratch']
  %s0 = inlined_call_operand.vmem [shape: f32[16,128], index: 0, kind: input, shape index: {}]
  %s1 = inlined_call_operand.vmem [shape: bf16[128,128], index: 1, kind: input, shape index: {}]
  %s2 = inlined_call_operand.vmem [shape: f32[1,128], index: 2, kind: input, shape index: {}]
  %s3 = inlined_call_operand.vmem [shape: f32[16,128], index: 3, kind: output, shape index: {}]
  %s4 = sld [smem:[#allocation0]]
  $region22: #{transformer_apply.3} parent=0
    _
  %s6 = ssub.s32 1, %s4
  %s7 = scalar_select 0, %s6, %s4
  // Predicated region
  $region2: #{transformer_apply.3} parent=0 // pred_check
    _
  $region3: #{transformer_apply.3} parent=0 // pred_check_branch
    %9 = sbr.rel (0) target = $region5
  $region4: #{transformer_apply.3} parent=0 // pred_region
    _
  $region5: #{transformer_apply.3} parent=0 // pred_fallthru
    _
  // Predicated region
  $region6: #{transformer_apply.3} parent=0 // pred_check
    _
  $region7: #{transformer_apply.3} parent=0 // pred_check_branch
    %11 = sbr.rel (0) target = $region9
  $region8: #{transformer_apply.3} parent=0 // pred_region
    _
  $region9: #{transformer_apply.3} parent=0 // pred_fallthru
    _
  // Predicated region
  $region10: #{transformer_apply.3} parent=0 // pred_check
    _
  $region11: #{transformer_apply.3} parent=0 // pred_check_branch
    %13 = sbr.rel (0) target = $region13
  $region12: #{transformer_apply.3} parent=0 // pred_region
    _
  $region13: #{transformer_apply.3} parent=0 // pred_fallthru
    _
  %v14 = vld [vmem:[%s0] sm:$0xff]
  %v15 = vld [vmem:[%s0 + $0x8] sm:$0xff]
  %v16 = vpack.c.bf16 %v15, %v14
  %v17 = vld [vmem:[%s1] sm:$0xf]
  %v18 = vld [vmem:[%s1 + $0x4] sm:$0xf]
  %v19 = vld [vmem:[%s1 + $0x8] sm:$0xf]
  %v20 = vld [vmem:[%s1 + $0xc] sm:$0xf]
  %v21 = vld [vmem:[%s1 + $0x10] sm:$0xf]
  %v22 = vld [vmem:[%s1 + $0x14] sm:$0xf]
  %v23 = vld [vmem:[%s1 + $0x18] sm:$0xf]
  %v24 = vld [vmem:[%s1 + $0x1c] sm:$0xf]
  %v25 = vld [vmem:[%s1 + $0x20] sm:$0xf]
  %v26 = vld [vmem:[%s1 + $0x24] sm:$0xf]
  %v27 = vld [vmem:[%s1 + $0x28] sm:$0xf]
  %v28 = vld [vmem:[%s1 + $0x2c] sm:$0xf]
  %v29 = vld [vmem:[%s1 + $0x30] sm:$0xf]
  %v30 = vld [vmem:[%s1 + $0x34] sm:$0xf]
  %v31 = vld [vmem:[%s1 + $0x38] sm:$0xf]
  %v32 = vld [vmem:[%s1 + $0x3c] sm:$0xf]
  %v33 = vld [vmem:[%s2] sm:$0x1]
  %v35 = vperm.slane %v33, 0
  %v53 = vunpack.c.l.b16 %v17
  %v54 = vunpack.c.l.b16 %v18
  %v55 = vunpack.c.l.b16 %v19
  %v56 = vunpack.c.l.b16 %v20
  %v57 = vunpack.c.l.b16 %v21
  %v58 = vunpack.c.l.b16 %v22
  %v59 = vunpack.c.l.b16 %v23
  %v60 = vunpack.c.l.b16 %v24
  %v61 = vunpack.c.l.b16 %v25
  %v62 = vunpack.c.l.b16 %v26
  %v63 = vunpack.c.l.b16 %v27
  %v64 = vunpack.c.l.b16 %v28
  %v65 = vunpack.c.l.b16 %v29
  %v66 = vunpack.c.l.b16 %v30
  %v67 = vunpack.c.l.b16 %v31
  %v68 = vunpack.c.l.b16 %v32
  %v69 = vpack.c.b16 %v54, %v53
  %v70 = vpack.c.b16 %v56, %v55
  %v71 = vpack.c.b16 %v58, %v57
  %v72 = vpack.c.b16 %v60, %v59
  %v73 = vpack.c.b16 %v62, %v61
  %v74 = vpack.c.b16 %v64, %v63
  %v75 = vpack.c.b16 %v66, %v65
  %v76 = vpack.c.b16 %v68, %v67
  %85 = vmatpush.bf16.msra.mxu0 %v76
  %86 = vmatpush.bf16.msra.mxu0 %v75
  %87 = vmatpush.bf16.msra.mxu0 %v74
  %88 = vmatpush.bf16.msra.mxu0 %v73
  %89 = vmatpush.bf16.msra.mxu0 %v72
  %90 = vmatpush.bf16.msra.mxu0 %v71
  %91 = vmatpush.bf16.msra.mxu0 %v70
  %92 = vmatpush.bf16.msra.mxu0 %v69
  %93 = vmatmul.bf16.gmra.mxu0 %v16
  %v94 = vpop.f32.mrf.mxu0
  %v95 = vadd.f32 %v35, %v94
  %v96 = vpop.f32.mrf.mxu0
  %v97 = vadd.f32 %v35, %v96
  %98 = vdwg.mxu0
  %99 = vst [vmem:[%s3] sm:$0xff] %v95
  %100 = vst [vmem:[%s3 + $0x8] sm:$0xff] %v97
  // Predicated region
  $region14: #{transformer_apply.3} parent=0 // pred_check
    _
  $region15: #{transformer_apply.3} parent=0 // pred_check_branch
    %102 = sbr.rel (0) target = $region17
  $region16: #{transformer_apply.3} parent=0 // pred_region
    _
  $region17: #{transformer_apply.3} parent=0 // pred_fallthru
    _
  // Predicated region
  $region18: #{transformer_apply.3} parent=0 // pred_check
    _
  $region19: #{transformer_apply.3} parent=0 // pred_check_branch
    %104 = sbr.rel (0) target = $region21
  $region20: #{transformer_apply.3} parent=0 // pred_region
    _
  $region21: #{transformer_apply.3} parent=0 // pred_fallthru
    _

// kernel: transformer_apply.2
$region0: #{transformer_apply.2}
  #allocation0 [shape = 'u32[]', space=smem, size = 0x4, offset = 0x4, fixed_abs, tag = 'smem constant byte address 0x4 - core index']
  #allocation1 [shape = 'u32[72,128]{1,0:T(1,128)}', space=vmem, size = 0x9000, scoped, tag = 'internal scratch']
  #allocation2 [shape = 'f32[16,128]{1,0:T(8,128)}', space=vmem, size = 0x2000, scoped, tag = 'scratch operand']
  %s0 = inlined_call_operand.vmem [shape: f32[16,128], index: 0, kind: input, shape index: {}]
  %s1 = inlined_call_operand.hbm [shape: bf16[2,128,512], index: 1, kind: input, shape index: {}]
  %s2 = inlined_call_operand.hbm [shape: bf16[2,128,512], index: 2, kind: input, shape index: {}]
  %s3 = inlined_call_operand.hbm [shape: bf16[2,128,512], index: 3, kind: input, shape index: {}]
  %s4 = inlined_call_operand.hbm [shape: bf16[2,512,128], index: 4, kind: input, shape index: {}]
  %s5 = inlined_call_operand.vmem [shape: f32[2,1,128], index: 5, kind: input, shape index: {}]
  %s6 = inlined_call_operand.vmem [shape: f32[2,1,128], index: 6, kind: input, shape index: {}]
  %s7 = inlined_call_operand.vmem [shape: bf16[2,128,128], index: 7, kind: input, shape index: {}]
  %s8 = inlined_call_operand.vmem [shape: f32[2,1,128], index: 8, kind: input, shape index: {}]
  %s9 = inlined_call_operand.vmem [shape: bf16[2,128,128], index: 9, kind: input, shape index: {}]
  %s10 = inlined_call_operand.vmem [shape: f32[2,1,128], index: 10, kind: input, shape index: {}]
  %s11 = inlined_call_operand.vmem [shape: f32[2,1,128], index: 11, kind: input, shape index: {}]
  %s12 = inlined_call_operand.vmem [shape: f32[2,1,128], index: 12, kind: input, shape index: {}]
  %s13 = inlined_call_operand.vmem [shape: f32[16,128], index: 13, kind: output, shape index: {}]
  %s14 = sld [smem:[#allocation0]]
  $region109: #{transformer_apply.2} parent=0
    _
  %s16 = ssub.s32 1, %s14
  %s17 = scalar_select 0, %s16, %s14
  $region1: #{transformer_apply.2} parent=0
    #allocation3 [shape = 'u8[262144]{0}', space=vmem, size = 0x40000, scoped, tag = 'input window, operand 1']
    #allocation4 [shape = 's32[2]{0}', space=sflag, size = 0x8, scoped, tag = 'scoped memory for transformer_apply.2']
    #allocation5 [shape = 'u8[262144]{0}', space=vmem, size = 0x40000, scoped, tag = 'input window, operand 2']
    #allocation6 [shape = 's32[2]{0}', space=sflag, size = 0x8, scoped, tag = 'scoped memory for transformer_apply.2']
    #allocation7 [shape = 'u8[262144]{0}', space=vmem, size = 0x40000, scoped, tag = 'input window, operand 3']
    #allocation8 [shape = 'u8[262144]{0}', space=vmem, size = 0x40000, scoped, tag = 'input window, operand 4']
    #allocation9 [shape = 's32[2]{0}', space=sflag, size = 0x8, scoped, tag = 'scoped memory for transformer_apply.2']
    %18 = vsyncpa [#allocation4], 0
    %s19 = scalar_lea.sflag [#allocation4], 1
    %20 = vsyncpa %s19, 0
    %21 = vsyncpa [#allocation6], 0
    %s22 = scalar_lea.sflag [#allocation6], 1
    %23 = vsyncpa %s22, 0
    %24 = vsyncpa [#allocation9], 0
    %s25 = scalar_lea.sflag [#allocation9], 1
    %26 = vsyncpa %s25, 0
    loop: start=0, step=1, limit=4
    $region2: #{transformer_apply.2} parent=1 // loop_pre_header
      _
    $region3: #{transformer_apply.2} parent=1 // loop_header
      %s28 = sphi 0, %s32
      %p29 = scmp.ge.s32.totalorder %s28, 4
      %s36 = sphi 0, %s36
      %s38 = sphi 0, %s36
      %s39 = sphi 0, %s38
      %s53 = sphi 0, %s39
      %s59 = sphi 0, %s61
      %s62 = sphi 0, %s59
      %s63 = sphi 0, %s62
      %s79 = sphi 0, %s63
      %s85 = sphi 0, %s87
      %s88 = sphi 0, %s85
      %s89 = sphi 0, %s88
      %s105 = sphi 0, %s89
      %s111 = sphi 0, %s113
      %s114 = sphi 0, %s111
      %s115 = sphi 0, %s114
      %s131 = sphi 0, %s115
      %s137 = sphi 0, %s139
      %s140 = sphi 0, %s137
      %s141 = sphi 0, %s140
      %s157 = sphi 0, %s141
      %s163 = sphi 0, %s165
      %s166 = sphi 0, %s163
      %s167 = sphi 0, %s166
      %s183 = sphi 0, %s167
      %s189 = sphi 0, %s191
      %s192 = sphi 0, %s189
      %s193 = sphi 0, %s192
      %s209 = sphi 0, %s193
      %s215 = sphi 0, %s217
      %s218 = sphi 0, %s215
      %s219 = sphi 0, %s218
      %s235 = sphi 0, %s219
      %s241 = sphi 0, %s243
      %s244 = sphi 0, %s241
      %s245 = sphi 0, %s244
      %s261 = sphi 0, %s245
      %s267 = sphi 0, %s269
      %s270 = sphi 0, %s267
      %s271 = sphi 0, %s270
      %s287 = sphi 0, %s271
      %s293 = sphi 0, %s295
      %s296 = sphi 0, %s293
      %s297 = sphi 0, %s296
      %s313 = sphi 0, %s297
      %s319 = sphi 0, %s321
      %s322 = sphi 0, %s319
      %s323 = sphi 0, %s322
      %s339 = sphi 0, %s323
      %s345 = sphi 0, %s347
      %s348 = sphi 0, %s345
      %s349 = sphi 0, %s348
      %s365 = sphi 0, %s349
      %s369 = sphi 0, %s369
      %s371 = sphi 0, %s369
      %s372 = sphi 0, %s371
      %s386 = sphi 0, %s372
    $region4: #{transformer_apply.2} parent=1 // loop_header_branch
      %31 = sbr.rel (%p29) target = $region8
    $region5: #{transformer_apply.2} parent=1 // loop_body
      %s33 = ssub.s32 %s28, 1
      %s34 = ssub.s32 %s28, 2
      %s35 = sadd.s32 %s28, 1
      %s37 = sadd.s32 %s36, 1
      %p40 = scmp.eq.s32.totalorder %s28, 1
      %p41 = scmp.ne.s32.totalorder %s36, %s38
      %p42 = scmp.eq.s32.totalorder %s28, 0
      %p43 = por %p41, %p42
      %p44 = scmp.ne.s32.totalorder %s36, %s38
      %p45 = scmp.eq.s32.totalorder %s33, 1
      %p46 = por %p44, %p45
      %p47 = scmp.ne.s32.totalorder %s38, %s39
      %p48 = scmp.eq.s32.totalorder %s33, 0
      %p49 = por %p47, %p48
      %p50 = scmp.ne.s32.totalorder %s38, %s39
      %p51 = scmp.eq.s32.totalorder %s34, 1
      %p52 = por %p50, %p51
      %p54 = scmp.ne.s32.totalorder %s39, %s53
      %p55 = scmp.eq.s32.totalorder %s34, 0
      %p56 = por %p54, %p55
      %s57 = ssub.s32 %s28, %s35
      %p58 = scmp.eq.s32.totalorder %s57, 0
      %s60 = sadd.s32 %s59, 1
      %s61 = scalar_select %p58, %s59, %s60
      %p64 = pneg %p58
      %p65 = scmp.eq.s32.totalorder %s28, 1
      %p66 = por %p64, %p65
      %p67 = scmp.ne.s32.totalorder %s59, %s62
      %p68 = scmp.eq.s32.totalorder %s28, 0
      %p69 = por %p67, %p68
      %p70 = scmp.ne.s32.totalorder %s59, %s62
      %p71 = scmp.eq.s32.totalorder %s33, 1
      %p72 = por %p70, %p71
      %p73 = scmp.ne.s32.totalorder %s62, %s63
      %p74 = scmp.eq.s32.totalorder %s33, 0
      %p75 = por %p73, %p74
      %p76 = scmp.ne.s32.totalorder %s62, %s63
      %p77 = scmp.eq.s32.totalorder %s34, 1
      %p78 = por %p76, %p77
      %p80 = scmp.ne.s32.totalorder %s63, %s79
      %p81 = scmp.eq.s32.totalorder %s34, 0
      %p82 = por %p80, %p81
      %s83 = ssub.s32 %s28, %s35
      %p84 = scmp.eq.s32.totalorder %s83, 0
      %s86 = sadd.s32 %s85, 1
      %s87 = scalar_select %p84, %s85, %s86
      %p90 = pneg %p84
      %p91 = scmp.eq.s32.totalorder %s28, 1
      %p92 = por %p90, %p91
      %p93 = scmp.ne.s32.totalorder %s85, %s88
      %p94 = scmp.eq.s32.totalorder %s28, 0
      %p95 = por %p93, %p94
      %p96 = scmp.ne.s32.totalorder %s85, %s88
      %p97 = scmp.eq.s32.totalorder %s33, 1
      %p98 = por %p96, %p97
      %p99 = scmp.ne.s32.totalorder %s88, %s89
      %p100 = scmp.eq.s32.totalorder %s33, 0
      %p101 = por %p99, %p100
      %p102 = scmp.ne.s32.totalorder %s88, %s89
      %p103 = scmp.eq.s32.totalorder %s34, 1
      %p104 = por %p102, %p103
      %p106 = scmp.ne.s32.totalorder %s89, %s105
      %p107 = scmp.eq.s32.totalorder %s34, 0
      %p108 = por %p106, %p107
      %s109 = ssub.s32 %s28, %s35
      %p110 = scmp.eq.s32.totalorder %s109, 0
      %s112 = sadd.s32 %s111, 1
      %s113 = scalar_select %p110, %s111, %s112
      %p116 = pneg %p110
      %p117 = scmp.eq.s32.totalorder %s28, 1
      %p118 = por %p116, %p117
      %p119 = scmp.ne.s32.totalorder %s111, %s114
      %p120 = scmp.eq.s32.totalorder %s28, 0
      %p121 = por %p119, %p120
      %p122 = scmp.ne.s32.totalorder %s111, %s114
      %p123 = scmp.eq.s32.totalorder %s33, 1
      %p124 = por %p122, %p123
      %p125 = scmp.ne.s32.totalorder %s114, %s115
      %p126 = scmp.eq.s32.totalorder %s33, 0
      %p127 = por %p125, %p126
      %p128 = scmp.ne.s32.totalorder %s114, %s115
      %p129 = scmp.eq.s32.totalorder %s34, 1
      %p130 = por %p128, %p129
      %p132 = scmp.ne.s32.totalorder %s115, %s131
      %p133 = scmp.eq.s32.totalorder %s34, 0
      %p134 = por %p132, %p133
      %s135 = ssub.s32 %s28, %s35
      %p136 = scmp.eq.s32.totalorder %s135, 0
      %s138 = sadd.s32 %s137, 1
      %s139 = scalar_select %p136, %s137, %s138
      %p142 = pneg %p136
      %p143 = scmp.eq.s32.totalorder %s28, 1
      %p144 = por %p142, %p143
      %p145 = scmp.ne.s32.totalorder %s137, %s140
      %p146 = scmp.eq.s32.totalorder %s28, 0
      %p147 = por %p145, %p146
      %p148 = scmp.ne.s32.totalorder %s137, %s140
      %p149 = scmp.eq.s32.totalorder %s33, 1
      %p150 = por %p148, %p149
      %p151 = scmp.ne.s32.totalorder %s140, %s141
      %p152 = scmp.eq.s32.totalorder %s33, 0
      %p153 = por %p151, %p152
      %p154 = scmp.ne.s32.totalorder %s140, %s141
      %p155 = scmp.eq.s32.totalorder %s34, 1
      %p156 = por %p154, %p155
      %p158 = scmp.ne.s32.totalorder %s141, %s157
      %p159 = scmp.eq.s32.totalorder %s34, 0
      %p160 = por %p158, %p159
      %s161 = ssub.s32 %s28, %s35
      %p162 = scmp.eq.s32.totalorder %s161, 0
      %s164 = sadd.s32 %s163, 1
      %s165 = scalar_select %p162, %s163, %s164
      %p168 = pneg %p162
      %p169 = scmp.eq.s32.totalorder %s28, 1
      %p170 = por %p168, %p169
      %p171 = scmp.ne.s32.totalorder %s163, %s166
      %p172 = scmp.eq.s32.totalorder %s28, 0
      %p173 = por %p171, %p172
      %p174 = scmp.ne.s32.totalorder %s163, %s166
      %p175 = scmp.eq.s32.totalorder %s33, 1
      %p176 = por %p174, %p175
      %p177 = scmp.ne.s32.totalorder %s166, %s167
      %p178 = scmp.eq.s32.totalorder %s33, 0
      %p179 = por %p177, %p178
      %p180 = scmp.ne.s32.totalorder %s166, %s167
      %p181 = scmp.eq.s32.totalorder %s34, 1
      %p182 = por %p180, %p181
      %p184 = scmp.ne.s32.totalorder %s167, %s183
      %p185 = scmp.eq.s32.totalorder %s34, 0
      %p186 = por %p184, %p185
      %s187 = ssub.s32 %s28, %s35
      %p188 = scmp.eq.s32.totalorder %s187, 0
      %s190 = sadd.s32 %s189, 1
      %s191 = scalar_select %p188, %s189, %s190
      %p194 = pneg %p188
      %p195 = scmp.eq.s32.totalorder %s28, 1
      %p196 = por %p194, %p195
      %p197 = scmp.ne.s32.totalorder %s189, %s192
      %p198 = scmp.eq.s32.totalorder %s28, 0
      %p199 = por %p197, %p198
      %p200 = scmp.ne.s32.totalorder %s189, %s192
      %p201 = scmp.eq.s32.totalorder %s33, 1
      %p202 = por %p200, %p201
      %p203 = scmp.ne.s32.totalorder %s192, %s193
      %p204 = scmp.eq.s32.totalorder %s33, 0
      %p205 = por %p203, %p204
      %p206 = scmp.ne.s32.totalorder %s192, %s193
      %p207 = scmp.eq.s32.totalorder %s34, 1
      %p208 = por %p206, %p207
      %p210 = scmp.ne.s32.totalorder %s193, %s209
      %p211 = scmp.eq.s32.totalorder %s34, 0
      %p212 = por %p210, %p211
      %s213 = ssub.s32 %s28, %s35
      %p214 = scmp.eq.s32.totalorder %s213, 0
      %s216 = sadd.s32 %s215, 1
      %s217 = scalar_select %p214, %s215, %s216
      %p220 = pneg %p214
      %p221 = scmp.eq.s32.totalorder %s28, 1
      %p222 = por %p220, %p221
      %p223 = scmp.ne.s32.totalorder %s215, %s218
      %p224 = scmp.eq.s32.totalorder %s28, 0
      %p225 = por %p223, %p224
      %p226 = scmp.ne.s32.totalorder %s215, %s218
      %p227 = scmp.eq.s32.totalorder %s33, 1
      %p228 = por %p226, %p227
      %p229 = scmp.ne.s32.totalorder %s218, %s219
      %p230 = scmp.eq.s32.totalorder %s33, 0
      %p231 = por %p229, %p230
      %p232 = scmp.ne.s32.totalorder %s218, %s219
      %p233 = scmp.eq.s32.totalorder %s34, 1
      %p234 = por %p232, %p233
      %p236 = scmp.ne.s32.totalorder %s219, %s235
      %p237 = scmp.eq.s32.totalorder %s34, 0
      %p238 = por %p236, %p237
      %s239 = ssub.s32 %s28, %s35
      %p240 = scmp.eq.s32.totalorder %s239, 0
      %s242 = sadd.s32 %s241, 1
      %s243 = scalar_select %p240, %s241, %s242
      %p246 = pneg %p240
      %p247 = scmp.eq.s32.totalorder %s28, 1
      %p248 = por %p246, %p247
      %p249 = scmp.ne.s32.totalorder %s241, %s244
      %p250 = scmp.eq.s32.totalorder %s28, 0
      %p251 = por %p249, %p250
      %p252 = scmp.ne.s32.totalorder %s241, %s244
      %p253 = scmp.eq.s32.totalorder %s33, 1
      %p254 = por %p252, %p253
      %p255 = scmp.ne.s32.totalorder %s244, %s245
      %p256 = scmp.eq.s32.totalorder %s33, 0
      %p257 = por %p255, %p256
      %p258 = scmp.ne.s32.totalorder %s244, %s245
      %p259 = scmp.eq.s32.totalorder %s34, 1
      %p260 = por %p258, %p259
      %p262 = scmp.ne.s32.totalorder %s245, %s261
      %p263 = scmp.eq.s32.totalorder %s34, 0
      %p264 = por %p262, %p263
      %s265 = ssub.s32 %s28, %s35
      %p266 = scmp.eq.s32.totalorder %s265, 0
      %s268 = sadd.s32 %s267, 1
      %s269 = scalar_select %p266, %s267, %s268
      %p272 = pneg %p266
      %p273 = scmp.eq.s32.totalorder %s28, 1
      %p274 = por %p272, %p273
      %p275 = scmp.ne.s32.totalorder %s267, %s270
      %p276 = scmp.eq.s32.totalorder %s28, 0
      %p277 = por %p275, %p276
      %p278 = scmp.ne.s32.totalorder %s267, %s270
      %p279 = scmp.eq.s32.totalorder %s33, 1
      %p280 = por %p278, %p279
      %p281 = scmp.ne.s32.totalorder %s270, %s271
      %p282 = scmp.eq.s32.totalorder %s33, 0
      %p283 = por %p281, %p282
      %p284 = scmp.ne.s32.totalorder %s270, %s271
      %p285 = scmp.eq.s32.totalorder %s34, 1
      %p286 = por %p284, %p285
      %p288 = scmp.ne.s32.totalorder %s271, %s287
      %p289 = scmp.eq.s32.totalorder %s34, 0
      %p290 = por %p288, %p289
      %s291 = ssub.s32 %s28, %s35
      %p292 = scmp.eq.s32.totalorder %s291, 0
      %s294 = sadd.s32 %s293, 1
      %s295 = scalar_select %p292, %s293, %s294
      %p298 = pneg %p292
      %p299 = scmp.eq.s32.totalorder %s28, 1
      %p300 = por %p298, %p299
      %p301 = scmp.ne.s32.totalorder %s293, %s296
      %p302 = scmp.eq.s32.totalorder %s28, 0
      %p303 = por %p301, %p302
      %p304 = scmp.ne.s32.totalorder %s293, %s296
      %p305 = scmp.eq.s32.totalorder %s33, 1
      %p306 = por %p304, %p305
      %p307 = scmp.ne.s32.totalorder %s296, %s297
      %p308 = scmp.eq.s32.totalorder %s33, 0
      %p309 = por %p307, %p308
      %p310 = scmp.ne.s32.totalorder %s296, %s297
      %p311 = scmp.eq.s32.totalorder %s34, 1
      %p312 = por %p310, %p311
      %p314 = scmp.ne.s32.totalorder %s297, %s313
      %p315 = scmp.eq.s32.totalorder %s34, 0
      %p316 = por %p314, %p315
      %s317 = ssub.s32 %s28, %s35
      %p318 = scmp.eq.s32.totalorder %s317, 0
      %s320 = sadd.s32 %s319, 1
      %s321 = scalar_select %p318, %s319, %s320
      %p324 = pneg %p318
      %p325 = scmp.eq.s32.totalorder %s28, 1
      %p326 = por %p324, %p325
      %p327 = scmp.ne.s32.totalorder %s319, %s322
      %p328 = scmp.eq.s32.totalorder %s28, 0
      %p329 = por %p327, %p328
      %p330 = scmp.ne.s32.totalorder %s319, %s322
      %p331 = scmp.eq.s32.totalorder %s33, 1
      %p332 = por %p330, %p331
      %p333 = scmp.ne.s32.totalorder %s322, %s323
      %p334 = scmp.eq.s32.totalorder %s33, 0
      %p335 = por %p333, %p334
      %p336 = scmp.ne.s32.totalorder %s322, %s323
      %p337 = scmp.eq.s32.totalorder %s34, 1
      %p338 = por %p336, %p337
      %p340 = scmp.ne.s32.totalorder %s323, %s339
      %p341 = scmp.eq.s32.totalorder %s34, 0
      %p342 = por %p340, %p341
      %s343 = ssub.s32 %s28, %s35
      %p344 = scmp.eq.s32.totalorder %s343, 0
      %s346 = sadd.s32 %s345, 1
      %s347 = scalar_select %p344, %s345, %s346
      %p350 = pneg %p344
      %p351 = scmp.eq.s32.totalorder %s28, 1
      %p352 = por %p350, %p351
      %p353 = scmp.ne.s32.totalorder %s345, %s348
      %p354 = scmp.eq.s32.totalorder %s28, 0
      %p355 = por %p353, %p354
      %p356 = scmp.ne.s32.totalorder %s345, %s348
      %p357 = scmp.eq.s32.totalorder %s33, 1
      %p358 = por %p356, %p357
      %p359 = scmp.ne.s32.totalorder %s348, %s349
      %p360 = scmp.eq.s32.totalorder %s33, 0
      %p361 = por %p359, %p360
      %p362 = scmp.ne.s32.totalorder %s348, %s349
      %p363 = scmp.eq.s32.totalorder %s34, 1
      %p364 = por %p362, %p363
      %p366 = scmp.ne.s32.totalorder %s349, %s365
      %p367 = scmp.eq.s32.totalorder %s34, 0
      %p368 = por %p366, %p367
      %s370 = sadd.s32 %s369, 1
      %p373 = scmp.eq.s32.totalorder %s28, 1
      %p374 = scmp.ne.s32.totalorder %s369, %s371
      %p375 = scmp.eq.s32.totalorder %s28, 0
      %p376 = por %p374, %p375
      %p377 = scmp.ne.s32.totalorder %s369, %s371
      %p378 = scmp.eq.s32.totalorder %s33, 1
      %p379 = por %p377, %p378
      %p380 = scmp.ne.s32.totalorder %s371, %s372
      %p381 = scmp.eq.s32.totalorder %s33, 0
      %p382 = por %p380, %p381
      %p383 = scmp.ne.s32.totalorder %s371, %s372
      %p384 = scmp.eq.s32.totalorder %s34, 1
      %p385 = por %p383, %p384
      %p387 = scmp.ne.s32.totalorder %s372, %s386
      %p388 = scmp.eq.s32.totalorder %s34, 0
      %p389 = por %p387, %p388
      %p390 = scmp.le.s32.totalorder 1, %s28
      %p391 = scmp.lt.s32.totalorder %s28, 3
      %p392 = pnand %p390, %p391
      %p393 = pneg %p392
      // Predicated region
      $region9: #{transformer_apply.2} parent=5 // pred_check
        _
      $region10: #{transformer_apply.2} parent=5 // pred_check_branch
        %395 = sbr.rel (%p392) target = $region12
      $region11: #{transformer_apply.2} parent=5 // pred_region
        %s396 = ssub.s32 %s28, 1
        // Predicated region
        $region13: #{transformer_apply.2} parent=11 // pred_check
          %p397 = pneg %p49
        $region14: #{transformer_apply.2} parent=11 // pred_check_branch
          %399 = sbr.rel (%p397) target = $region16
        $region15: #{transformer_apply.2} parent=11 // pred_region
          _
        $region16: #{transformer_apply.2} parent=11 // pred_fallthru
          _
      $region12: #{transformer_apply.2} parent=5 // pred_fallthru
        _
      %p400 = scmp.lt.s32.totalorder %s28, 2
      // Predicated region
      $region17: #{transformer_apply.2} parent=5 // pred_check
        %p401 = pneg %p400
      $region18: #{transformer_apply.2} parent=5 // pred_check_branch
        %403 = sbr.rel (%p401) target = $region20
      $region19: #{transformer_apply.2} parent=5 // pred_region
        // Predicated region
        $region21: #{transformer_apply.2} parent=19 // pred_check
          %p404 = pneg %p69
        $region22: #{transformer_apply.2} parent=19 // pred_check_branch
          %406 = sbr.rel (%p404) target = $region24
        $region23: #{transformer_apply.2} parent=19 // pred_region
          %s407 = sand.u32 %s59, 1
          %s408 = scalar_lea.sflag [#allocation4], %s407
          %s409 = sand.u32 %s59, 1
          %s410 = smul.addr %s409, 256
          %s411 = scalar_lea.vmem [#allocation3], %s410
          %413 = vsyncadd %s408, 0
          %s414 = smul.addr %s28, 64
          %s415 = smul.addr %s414, 4
          %s416 = scalar_lea.hbm %s1, %s415
          %s417 = sshll.u32 %s416, 4
          %s418 = int_to_ptr.hbm [resolvable:$true] %s417
          %s419 = sshll.u32 %s411, 4
          %s420 = int_to_ptr.vmem [resolvable:$true] %s419
          %425 = dma.hbm_to_vmem [thread:$0]  %s418, 4096, %s420, %s408, 256, 256, 16
        $region24: #{transformer_apply.2} parent=19 // pred_fallthru
          _
        // Predicated region
        $region25: #{transformer_apply.2} parent=19 // pred_check
          %p426 = pneg %p95
        $region26: #{transformer_apply.2} parent=19 // pred_check_branch
          %428 = sbr.rel (%p426) target = $region28
        $region27: #{transformer_apply.2} parent=19 // pred_region
          %s429 = sand.u32 %s28, 1
          %s430 = scalar_lea.sflag [#allocation6], %s429
          %s431 = sand.u32 %s85, 1
          %s432 = smul.addr %s431, 256
          %s433 = scalar_lea.vmem [#allocation5], %s432
          %435 = vsyncadd %s430, 0
          %s436 = smul.addr %s28, 64
          %s437 = smul.addr %s436, 4
          %s438 = scalar_lea.hbm %s2, %s437
          %s439 = sshll.u32 %s438, 4
          %s440 = int_to_ptr.hbm [resolvable:$true] %s439
          %s441 = sshll.u32 %s433, 4
          %s442 = int_to_ptr.vmem [resolvable:$true] %s441
          %447 = dma.hbm_to_vmem [thread:$0]  %s440, 4096, %s442, %s430, 256, 256, 16
        $region28: #{transformer_apply.2} parent=19 // pred_fallthru
          _
        // Predicated region
        $region29: #{transformer_apply.2} parent=19 // pred_check
          %p448 = pneg %p121
        $region30: #{transformer_apply.2} parent=19 // pred_check_branch
          %450 = sbr.rel (%p448) target = $region32
        $region31: #{transformer_apply.2} parent=19 // pred_region
          %s451 = sand.u32 %s28, 1
          %s452 = scalar_lea.sflag [#allocation6], %s451
          %s453 = sand.u32 %s111, 1
          %s454 = smul.addr %s453, 256
          %s455 = scalar_lea.vmem [#allocation7], %s454
          %457 = vsyncadd %s452, 0
          %s458 = smul.addr %s28, 64
          %s459 = smul.addr %s458, 4
          %s460 = scalar_lea.hbm %s3, %s459
          %s461 = sshll.u32 %s460, 4
          %s462 = int_to_ptr.hbm [resolvable:$true] %s461
          %s463 = sshll.u32 %s455, 4
          %s464 = int_to_ptr.vmem [resolvable:$true] %s463
          %469 = dma.hbm_to_vmem [thread:$0]  %s462, 4096, %s464, %s452, 256, 256, 16
        $region32: #{transformer_apply.2} parent=19 // pred_fallthru
          _
        // Predicated region
        $region33: #{transformer_apply.2} parent=19 // pred_check
          %p470 = pneg %p147
        $region34: #{transformer_apply.2} parent=19 // pred_check_branch
          %472 = sbr.rel (%p470) target = $region36
        $region35: #{transformer_apply.2} parent=19 // pred_region
          %s473 = sand.u32 %s137, 1
          %s474 = scalar_lea.sflag [#allocation9], %s473
          %s475 = sand.u32 %s137, 1
          %s476 = smul.addr %s475, 256
          %s477 = scalar_lea.vmem [#allocation8], %s476
          %479 = vsyncadd %s474, 0
          %s480 = smul.addr %s28, 64
          %s481 = smul.addr %s480, 4
          %s482 = scalar_lea.hbm %s4, %s481
          %s483 = sshll.u32 %s482, 4
          %s484 = int_to_ptr.hbm [resolvable:$true] %s483
          %s485 = sshll.u32 %s477, 4
          %s486 = int_to_ptr.vmem [resolvable:$true] %s485
          %491 = dma.hbm_to_vmem [thread:$0]  %s484, 4096, %s486, %s474, 64, 64, 4
        $region36: #{transformer_apply.2} parent=19 // pred_fallthru
          _
        // Predicated region
        $region37: #{transformer_apply.2} parent=19 // pred_check
          %p492 = pneg %p173
        $region38: #{transformer_apply.2} parent=19 // pred_check_branch
          %494 = sbr.rel (%p492) target = $region40
        $region39: #{transformer_apply.2} parent=19 // pred_region
          %p495 = scmp.lt.s32.totalorder %s28, 1
          %s496 = scalar_select %p495, %s28, 1
          %s497 = scalar_lea.vmem %s5, %s496
        $region40: #{transformer_apply.2} parent=19 // pred_fallthru
          _
        // Predicated region
        $region41: #{transformer_apply.2} parent=19 // pred_check
          %p498 = pneg %p199
        $region42: #{transformer_apply.2} parent=19 // pred_check_branch
          %500 = sbr.rel (%p498) target = $region44
        $region43: #{transformer_apply.2} parent=19 // pred_region
          %p501 = scmp.lt.s32.totalorder %s28, 1
          %s502 = scalar_select %p501, %s28, 1
          %s503 = scalar_lea.vmem %s6, %s502
        $region44: #{transformer_apply.2} parent=19 // pred_fallthru
          _
        // Predicated region
        $region45: #{transformer_apply.2} parent=19 // pred_check
          %p504 = pneg %p225
        $region46: #{transformer_apply.2} parent=19 // pred_check_branch
          %506 = sbr.rel (%p504) target = $region48
        $region47: #{transformer_apply.2} parent=19 // pred_region
          %p507 = scmp.lt.s32.totalorder %s28, 1
          %s508 = scalar_select %p507, %s28, 1
          %s509 = smul.addr %s508, 16
          %s510 = smul.addr %s509, 4
          %s511 = scalar_lea.vmem %s7, %s510
        $region48: #{transformer_apply.2} parent=19 // pred_fallthru
          _
        // Predicated region
        $region49: #{transformer_apply.2} parent=19 // pred_check
          %p512 = pneg %p251
        $region50: #{transformer_apply.2} parent=19 // pred_check_branch
          %514 = sbr.rel (%p512) target = $region52
        $region51: #{transformer_apply.2} parent=19 // pred_region
          %p515 = scmp.lt.s32.totalorder %s28, 1
          %s516 = scalar_select %p515, %s28, 1
          %s517 = scalar_lea.vmem %s8, %s516
        $region52: #{transformer_apply.2} parent=19 // pred_fallthru
          _
        // Predicated region
        $region53: #{transformer_apply.2} parent=19 // pred_check
          %p518 = pneg %p277
        $region54: #{transformer_apply.2} parent=19 // pred_check_branch
          %520 = sbr.rel (%p518) target = $region56
        $region55: #{transformer_apply.2} parent=19 // pred_region
          %p521 = scmp.lt.s32.totalorder %s28, 1
          %s522 = scalar_select %p521, %s28, 1
          %s523 = smul.addr %s522, 16
          %s524 = smul.addr %s523, 4
          %s525 = scalar_lea.vmem %s9, %s524
        $region56: #{transformer_apply.2} parent=19 // pred_fallthru
          _
        // Predicated region
        $region57: #{transformer_apply.2} parent=19 // pred_check
          %p526 = pneg %p303
        $region58: #{transformer_apply.2} parent=19 // pred_check_branch
          %528 = sbr.rel (%p526) target = $region60
        $region59: #{transformer_apply.2} parent=19 // pred_region
          %p529 = scmp.lt.s32.totalorder %s28, 1
          %s530 = scalar_select %p529, %s28, 1
          %s531 = scalar_lea.vmem %s10, %s530
        $region60: #{transformer_apply.2} parent=19 // pred_fallthru
          _
        // Predicated region
        $region61: #{transformer_apply.2} parent=19 // pred_check
          %p532 = pneg %p329
        $region62: #{transformer_apply.2} parent=19 // pred_check_branch
          %534 = sbr.rel (%p532) target = $region64
        $region63: #{transformer_apply.2} parent=19 // pred_region
          %p535 = scmp.lt.s32.totalorder %s28, 1
          %s536 = scalar_select %p535, %s28, 1
          %s537 = scalar_lea.vmem %s11, %s536
        $region64: #{transformer_apply.2} parent=19 // pred_fallthru
          _
        // Predicated region
        $region65: #{transformer_apply.2} parent=19 // pred_check
          %p538 = pneg %p355
        $region66: #{transformer_apply.2} parent=19 // pred_check_branch
          %540 = sbr.rel (%p538) target = $region68
        $region67: #{transformer_apply.2} parent=19 // pred_region
          %p541 = scmp.lt.s32.totalorder %s28, 1
          %s542 = scalar_select %p541, %s28, 1
          %s543 = scalar_lea.vmem %s12, %s542
        $region68: #{transformer_apply.2} parent=19 // pred_fallthru
          _
      $region20: #{transformer_apply.2} parent=5 // pred_fallthru
        _
      %p544 = scmp.le.s32.totalorder 1, %s28
      %p545 = scmp.lt.s32.totalorder %s28, 3
      %p546 = pnand %p544, %p545
      %p547 = pneg %p546
      // Predicated region
      $region69: #{transformer_apply.2} parent=5 // pred_check
        _
      $region70: #{transformer_apply.2} parent=5 // pred_check_branch
        %549 = sbr.rel (%p546) target = $region72
      $region71: #{transformer_apply.2} parent=5 // pred_region
        %s550 = ssub.s32 %s28, 1
        %s551 = sand.u32 %s62, 1
        %s552 = scalar_lea.sflag [#allocation4], %s551
        %s553 = sand.u32 %s62, 1
        %s554 = smul.addr %s553, 256
        %s555 = scalar_lea.vmem [#allocation3], %s554
        // Predicated region
        $region73: #{transformer_apply.2} parent=71 // pred_check
          %p556 = pneg %p75
        $region74: #{transformer_apply.2} parent=71 // pred_check_branch
          %558 = sbr.rel (%p556) target = $region76
        $region75: #{transformer_apply.2} parent=71 // pred_region
          %560 = dma.done %s552, 4096
        $region76: #{transformer_apply.2} parent=71 // pred_fallthru
          _
        %s561 = sand.u32 %s33, 1
        %s562 = scalar_lea.sflag [#allocation6], %s561
        %s563 = sand.u32 %s88, 1
        %s564 = smul.addr %s563, 256
        %s565 = scalar_lea.vmem [#allocation5], %s564
        // Predicated region
        $region77: #{transformer_apply.2} parent=71 // pred_check
          %p566 = pneg %p101
        $region78: #{transformer_apply.2} parent=71 // pred_check_branch
          %568 = sbr.rel (%p566) target = $region80
        $region79: #{transformer_apply.2} parent=71 // pred_region
          %570 = dma.done %s562, 4096
        $region80: #{transformer_apply.2} parent=71 // pred_fallthru
          _
        %s571 = sand.u32 %s33, 1
        %s572 = scalar_lea.sflag [#allocation6], %s571
        %s573 = sand.u32 %s114, 1
        %s574 = smul.addr %s573, 256
        %s575 = scalar_lea.vmem [#allocation7], %s574
        // Predicated region
        $region81: #{transformer_apply.2} parent=71 // pred_check
          %p576 = pneg %p127
        $region82: #{transformer_apply.2} parent=71 // pred_check_branch
          %578 = sbr.rel (%p576) target = $region84
        $region83: #{transformer_apply.2} parent=71 // pred_region
          %580 = dma.done %s572, 4096
        $region84: #{transformer_apply.2} parent=71 // pred_fallthru
          _
        %s581 = sand.u32 %s140, 1
        %s582 = scalar_lea.sflag [#allocation9], %s581
        %s583 = sand.u32 %s140, 1
        %s584 = smul.addr %s583, 256
        %s585 = scalar_lea.vmem [#allocation8], %s584
        // Predicated region
        $region85: #{transformer_apply.2} parent=71 // pred_check
          %p586 = pneg %p153
        $region86: #{transformer_apply.2} parent=71 // pred_check_branch
          %588 = sbr.rel (%p586) target = $region88
        $region87: #{transformer_apply.2} parent=71 // pred_region
          %590 = dma.done %s582, 4096
        $region88: #{transformer_apply.2} parent=71 // pred_fallthru
          _
        %p591 = pneg %p49
        %p592 = pneg %p46
        %s593 = sand.u32 %s62, 1
        %s594 = scalar_lea.sflag [#allocation4], %s593
        %s595 = sand.u32 %s62, 1
        %s596 = smul.addr %s595, 256
        %s597 = scalar_lea.vmem [#allocation3], %s596
        %p598 = pneg %p75
        %p599 = pneg %p72
        %s600 = sand.u32 %s33, 1
        %s601 = scalar_lea.sflag [#allocation6], %s600
        %s602 = sand.u32 %s88, 1
        %s603 = smul.addr %s602, 256
        %s604 = scalar_lea.vmem [#allocation5], %s603
        %p605 = pneg %p101
        %p606 = pneg %p98
        %s607 = sand.u32 %s33, 1
        %s608 = scalar_lea.sflag [#allocation6], %s607
        %s609 = sand.u32 %s114, 1
        %s610 = smul.addr %s609, 256
        %s611 = scalar_lea.vmem [#allocation7], %s610
        %p612 = pneg %p127
        %p613 = pneg %p124
        %s614 = sand.u32 %s140, 1
        %s615 = scalar_lea.sflag [#allocation9], %s614
        %s616 = sand.u32 %s140, 1
        %s617 = smul.addr %s616, 256
        %s618 = scalar_lea.vmem [#allocation8], %s617
        %p619 = pneg %p153
        %p620 = pneg %p150
        %p621 = scmp.lt.s32.totalorder %s33, 1
        %s622 = scalar_select %p621, %s33, 1
        %s623 = scalar_lea.vmem %s5, %s622
        %p624 = pneg %p179
        %p625 = pneg %p176
        %p626 = scmp.lt.s32.totalorder %s33, 1
        %s627 = scalar_select %p626, %s33, 1
        %s628 = scalar_lea.vmem %s6, %s627
        %p629 = pneg %p205
        %p630 = pneg %p202
        %p631 = scmp.lt.s32.totalorder %s33, 1
        %s632 = scalar_select %p631, %s33, 1
        %s633 = smul.addr %s632, 16
        %s634 = smul.addr %s633, 4
        %s635 = scalar_lea.vmem %s7, %s634
        %p636 = pneg %p231
        %p637 = pneg %p228
        %p638 = scmp.lt.s32.totalorder %s33, 1
        %s639 = scalar_select %p638, %s33, 1
        %s640 = scalar_lea.vmem %s8, %s639
        %p641 = pneg %p257
        %p642 = pneg %p254
        %p643 = scmp.lt.s32.totalorder %s33, 1
        %s644 = scalar_select %p643, %s33, 1
        %s645 = smul.addr %s644, 16
        %s646 = smul.addr %s645, 4
        %s647 = scalar_lea.vmem %s9, %s646
        %p648 = pneg %p283
        %p649 = pneg %p280
        %p650 = scmp.lt.s32.totalorder %s33, 1
        %s651 = scalar_select %p650, %s33, 1
        %s652 = scalar_lea.vmem %s10, %s651
        %p653 = pneg %p309
        %p654 = pneg %p306
        %p655 = scmp.lt.s32.totalorder %s33, 1
        %s656 = scalar_select %p655, %s33, 1
        %s657 = scalar_lea.vmem %s11, %s656
        %p658 = pneg %p335
        %p659 = pneg %p332
        %p660 = scmp.lt.s32.totalorder %s33, 1
        %s661 = scalar_select %p660, %s33, 1
        %s662 = scalar_lea.vmem %s12, %s661
        %p663 = pneg %p361
        %p664 = pneg %p358
        %p665 = pneg %p382
        %p666 = pneg %p379
        %p667 = scmp.lt.s32.totalorder %s33, 1
        %s668 = scalar_select %p667, %s33, 1
        %s669 = scalar_lea.vmem %s5, %s668
        %p670 = scmp.lt.s32.totalorder %s33, 1
        %s671 = scalar_select %p670, %s33, 1
        %s672 = scalar_lea.vmem %s6, %s671
        %p673 = scmp.lt.s32.totalorder %s33, 1
        %s674 = scalar_select %p673, %s33, 1
        %s675 = smul.addr %s674, 16
        %s676 = smul.addr %s675, 4
        %s677 = scalar_lea.vmem %s7, %s676
        %p678 = scmp.lt.s32.totalorder %s33, 1
        %s679 = scalar_select %p678, %s33, 1
        %s680 = scalar_lea.vmem %s8, %s679
        %p681 = scmp.lt.s32.totalorder %s33, 1
        %s682 = scalar_select %p681, %s33, 1
        %s683 = smul.addr %s682, 16
        %s684 = smul.addr %s683, 4
        %s685 = scalar_lea.vmem %s9, %s684
        %p686 = scmp.lt.s32.totalorder %s33, 1
        %s687 = scalar_select %p686, %s33, 1
        %s688 = scalar_lea.vmem %s10, %s687
        %p689 = scmp.lt.s32.totalorder %s33, 1
        %s690 = scalar_select %p689, %s33, 1
        %s691 = scalar_lea.vmem %s11, %s690
        %p692 = scmp.lt.s32.totalorder %s33, 1
        %s693 = scalar_select %p692, %s33, 1
        %s694 = scalar_lea.vmem %s12, %s693
        %p696 = scmp.eq.s32.totalorder %s33, 0
        // Predicated region
        $region89: #{transformer_apply.2} parent=71 // pred_check
          %p697 = pneg %p696
        $region90: #{transformer_apply.2} parent=71 // pred_check_branch
          %699 = sbr.rel (%p697) target = $region92
        $region91: #{transformer_apply.2} parent=71 // pred_region
          %v700 = vld [vmem:[%s0] sm:$0xff]
          %v701 = vld [vmem:[%s0 + $0x8] sm:$0xff]
          %702 = vst [vmem:[#allocation2] sm:$0xff] %v700
          %703 = vst [vmem:[#allocation2 + $0x8] sm:$0xff] %v701
        $region92: #{transformer_apply.2} parent=71 // pred_fallthru
          _
        %v704 = vld [vmem:[#allocation2] sm:$0xff]
        %v705 = vld [vmem:[#allocation2 + $0x8] sm:$0xff]
        %v706 = vlaneseq
        %v707 = vand.u32 %v706, 127
        %vm708 = vcmp.lt.s32.totalorder %v707, 32
        %v709 = vsel %vm708, 1, 0
        %v710 = vcvt.s32.f32 %v709
        %v711 = vpack.c.bf16 %v705, %v704
        %v712 = vld [vmem:[%s555] sm:$0xff]
        %v713 = vld [vmem:[%s555 + $0x8] sm:$0xff]
        %v714 = vld [vmem:[%s555 + $0x10] sm:$0xff]
        %v715 = vld [vmem:[%s555 + $0x18] sm:$0xff]
        %v716 = vld [vmem:[%s555 + $0x20] sm:$0xff]
        %v717 = vld [vmem:[%s555 + $0x28] sm:$0xff]
        %v718 = vld [vmem:[%s555 + $0x30] sm:$0xff]
        %v719 = vld [vmem:[%s555 + $0x38] sm:$0xff]
        %v720 = vld [vmem:[%s555 + $0x40] sm:$0xff]
        %v721 = vld [vmem:[%s555 + $0x48] sm:$0xff]
        %v722 = vld [vmem:[%s555 + $0x50] sm:$0xff]
        %v723 = vld [vmem:[%s555 + $0x58] sm:$0xff]
        %v724 = vld [vmem:[%s555 + $0x60] sm:$0xff]
        %v725 = vld [vmem:[%s555 + $0x68] sm:$0xff]
        %v726 = vld [vmem:[%s555 + $0x70] sm:$0xff]
        %v727 = vld [vmem:[%s555 + $0x78] sm:$0xff]
        %v728 = vld [vmem:[%s555 + $0x80] sm:$0xff]
        %v729 = vld [vmem:[%s555 + $0x88] sm:$0xff]
        %v730 = vld [vmem:[%s555 + $0x90] sm:$0xff]
        %v731 = vld [vmem:[%s555 + $0x98] sm:$0xff]
        %v732 = vld [vmem:[%s555 + $0xa0] sm:$0xff]
        %v733 = vld [vmem:[%s555 + $0xa8] sm:$0xff]
        %v734 = vld [vmem:[%s555 + $0xb0] sm:$0xff]
        %v735 = vld [vmem:[%s555 + $0xb8] sm:$0xff]
        %v736 = vld [vmem:[%s555 + $0xc0] sm:$0xff]
        %v737 = vld [vmem:[%s555 + $0xc8] sm:$0xff]
        %v738 = vld [vmem:[%s555 + $0xd0] sm:$0xff]
        %v739 = vld [vmem:[%s555 + $0xd8] sm:$0xff]
        %v740 = vld [vmem:[%s555 + $0xe0] sm:$0xff]
        %v741 = vld [vmem:[%s555 + $0xe8] sm:$0xff]
        %v742 = vld [vmem:[%s555 + $0xf0] sm:$0xff]
        %v743 = vld [vmem:[%s555 + $0xf8] sm:$0xff]
        %v776 = vunpack.c.l.b16 %v712
        %v777 = vunpack.c.h.b16 %v712
        %v778 = vunpack.c.l.b16 %v713
        %v779 = vunpack.c.h.b16 %v713
        %v780 = vunpack.c.l.b16 %v714
        %v781 = vunpack.c.h.b16 %v714
        %v782 = vunpack.c.l.b16 %v715
        %v783 = vunpack.c.h.b16 %v715
        %v784 = vunpack.c.l.b16 %v716
        %v785 = vunpack.c.h.b16 %v716
        %v786 = vunpack.c.l.b16 %v717
        %v787 = vunpack.c.h.b16 %v717
        %v788 = vunpack.c.l.b16 %v718
        %v789 = vunpack.c.h.b16 %v718
        %v790 = vunpack.c.l.b16 %v719
        %v791 = vunpack.c.h.b16 %v719
        %v792 = vunpack.c.l.b16 %v720
        %v793 = vunpack.c.h.b16 %v720
        %v794 = vunpack.c.l.b16 %v721
        %v795 = vunpack.c.h.b16 %v721
        %v796 = vunpack.c.l.b16 %v722
        %v797 = vunpack.c.h.b16 %v722
        %v798 = vunpack.c.l.b16 %v723
        %v799 = vunpack.c.h.b16 %v723
        %v800 = vunpack.c.l.b16 %v724
        %v801 = vunpack.c.h.b16 %v724
        %v802 = vunpack.c.l.b16 %v725
        %v803 = vunpack.c.h.b16 %v725
        %v804 = vunpack.c.l.b16 %v726
        %v805 = vunpack.c.h.b16 %v726
        %v806 = vunpack.c.l.b16 %v727
        %v807 = vunpack.c.h.b16 %v727
        %v808 = vunpack.c.l.b16 %v728
        %v809 = vunpack.c.h.b16 %v728
        %v810 = vunpack.c.l.b16 %v729
        %v811 = vunpack.c.h.b16 %v729
        %v812 = vunpack.c.l.b16 %v730
        %v813 = vunpack.c.h.b16 %v730
        %v814 = vunpack.c.l.b16 %v731
        %v815 = vunpack.c.h.b16 %v731
        %v816 = vunpack.c.l.b16 %v732
        %v817 = vunpack.c.h.b16 %v732
        %v818 = vunpack.c.l.b16 %v733
        %v819 = vunpack.c.h.b16 %v733
        %v820 = vunpack.c.l.b16 %v734
        %v821 = vunpack.c.h.b16 %v734
        %v822 = vunpack.c.l.b16 %v735
        %v823 = vunpack.c.h.b16 %v735
        %v824 = vunpack.c.l.b16 %v736
        %v825 = vunpack.c.h.b16 %v736
        %v826 = vunpack.c.l.b16 %v737
        %v827 = vunpack.c.h.b16 %v737
        %v828 = vunpack.c.l.b16 %v738
        %v829 = vunpack.c.h.b16 %v738
        %v830 = vunpack.c.l.b16 %v739
        %v831 = vunpack.c.h.b16 %v739
        %v832 = vunpack.c.l.b16 %v740
        %v833 = vunpack.c.h.b16 %v740
        %v834 = vunpack.c.l.b16 %v741
        %v835 = vunpack.c.h.b16 %v741
        %v836 = vunpack.c.l.b16 %v742
        %v837 = vunpack.c.h.b16 %v742
        %v838 = vunpack.c.l.b16 %v743
        %v839 = vunpack.c.h.b16 %v743
        %v840 = vpack.c.b16 %v780, %v776
        %v841 = vpack.c.b16 %v781, %v777
        %v842 = vpack.c.b16 %v782, %v778
        %v843 = vpack.c.b16 %v783, %v779
        %v844 = vpack.c.b16 %v788, %v784
        %v845 = vpack.c.b16 %v789, %v785
        %v846 = vpack.c.b16 %v790, %v786
        %v847 = vpack.c.b16 %v791, %v787
        %v848 = vpack.c.b16 %v796, %v792
        %v849 = vpack.c.b16 %v797, %v793
        %v850 = vpack.c.b16 %v798, %v794
        %v851 = vpack.c.b16 %v799, %v795
        %v852 = vpack.c.b16 %v804, %v800
        %v853 = vpack.c.b16 %v805, %v801
        %v854 = vpack.c.b16 %v806, %v802
        %v855 = vpack.c.b16 %v807, %v803
        %v856 = vpack.c.b16 %v812, %v808
        %v857 = vpack.c.b16 %v813, %v809
        %v858 = vpack.c.b16 %v814, %v810
        %v859 = vpack.c.b16 %v815, %v811
        %v860 = vpack.c.b16 %v820, %v816
        %v861 = vpack.c.b16 %v821, %v817
        %v862 = vpack.c.b16 %v822, %v818
        %v863 = vpack.c.b16 %v823, %v819
        %v864 = vpack.c.b16 %v828, %v824
        %v865 = vpack.c.b16 %v829, %v825
        %v866 = vpack.c.b16 %v830, %v826
        %v867 = vpack.c.b16 %v831, %v827
        %v868 = vpack.c.b16 %v836, %v832
        %v869 = vpack.c.b16 %v837, %v833
        %v870 = vpack.c.b16 %v838, %v834
        %v871 = vpack.c.b16 %v839, %v835
        %904 = vmatpush.bf16.msra.mxu0 %v868
        %905 = vmatpush.bf16.msra.mxu0 %v864
        %906 = vmatpush.bf16.msra.mxu0 %v860
        %907 = vmatpush.bf16.msra.mxu0 %v856
        %908 = vmatpush.bf16.msra.mxu0 %v852
        %909 = vmatpush.bf16.msra.mxu0 %v848
        %910 = vmatpush.bf16.msra.mxu0 %v844
        %911 = vmatpush.bf16.msra.mxu0 %v840
        %912 = vmatmul.bf16.gmra.mxu0 %v711
        %v913 = vpop.f32.mrf.mxu0
        %v914 = vadd.f32 0.0, %v913
        %v915 = vpop.f32.mrf.mxu0
        %v916 = vadd.f32 0.0, %v915
        %917 = vdwg.mxu0
        %918 = vmatpush.bf16.msra.mxu0 %v869
        %919 = vmatpush.bf16.msra.mxu0 %v865
        %920 = vmatpush.bf16.msra.mxu0 %v861
        %921 = vmatpush.bf16.msra.mxu0 %v857
        %922 = vmatpush.bf16.msra.mxu0 %v853
        %923 = vmatpush.bf16.msra.mxu0 %v849
        %924 = vmatpush.bf16.msra.mxu0 %v845
        %925 = vmatpush.bf16.msra.mxu0 %v841
        %926 = vmatmul.bf16.gmra.mxu0 %v711
        %v927 = vpop.f32.mrf.mxu0
        %v928 = vadd.f32 0.0, %v927
        %v929 = vpop.f32.mrf.mxu0
        %v930 = vadd.f32 0.0, %v929
        %931 = vdwg.mxu0
        %932 = vmatpush.bf16.msra.mxu0 %v870
        %933 = vmatpush.bf16.msra.mxu0 %v866
        %934 = vmatpush.bf16.msra.mxu0 %v862
        %935 = vmatpush.bf16.msra.mxu0 %v858
        %936 = vmatpush.bf16.msra.mxu0 %v854
        %937 = vmatpush.bf16.msra.mxu0 %v850
        %938 = vmatpush.bf16.msra.mxu0 %v846
        %939 = vmatpush.bf16.msra.mxu0 %v842
        %940 = vmatmul.bf16.gmra.mxu0 %v711
        %v941 = vpop.f32.mrf.mxu0
        %v942 = vadd.f32 0.0, %v941
        %v943 = vpop.f32.mrf.mxu0
        %v944 = vadd.f32 0.0, %v943
        %945 = vdwg.mxu0
        %946 = vmatpush.bf16.msra.mxu0 %v871
        %947 = vmatpush.bf16.msra.mxu0 %v867
        %948 = vmatpush.bf16.msra.mxu0 %v863
        %949 = vmatpush.bf16.msra.mxu0 %v859
        %950 = vmatpush.bf16.msra.mxu0 %v855
        %951 = vmatpush.bf16.msra.mxu0 %v851
        %952 = vmatpush.bf16.msra.mxu0 %v847
        %953 = vmatpush.bf16.msra.mxu0 %v843
        %954 = vmatmul.bf16.gmra.mxu0 %v711
        %v955 = vpop.f32.mrf.mxu0
        %v956 = vadd.f32 0.0, %v955
        %v957 = vpop.f32.mrf.mxu0
        %v958 = vadd.f32 0.0, %v957
        %959 = vdwg.mxu0
        %v960 = vmul.f32 %v914, 0.35355338
        %v961 = vmul.f32 %v928, 0.35355338
        %v962 = vmul.f32 %v942, 0.35355338
        %v963 = vmul.f32 %v956, 0.35355338
        %v964 = vmul.f32 %v916, 0.35355338
        %v965 = vmul.f32 %v930, 0.35355338
        %v966 = vmul.f32 %v944, 0.35355338
        %v967 = vmul.f32 %v958, 0.35355338
        %v968 = vld [vmem:[%s565] sm:$0xff]
        %v969 = vld [vmem:[%s565 + $0x8] sm:$0xff]
        %v970 = vld [vmem:[%s565 + $0x10] sm:$0xff]
        %v971 = vld [vmem:[%s565 + $0x18] sm:$0xff]
        %v972 = vld [vmem:[%s565 + $0x20] sm:$0xff]
        %v973 = vld [vmem:[%s565 + $0x28] sm:$0xff]
        %v974 = vld [vmem:[%s565 + $0x30] sm:$0xff]
        %v975 = vld [vmem:[%s565 + $0x38] sm:$0xff]
        %v976 = vld [vmem:[%s565 + $0x40] sm:$0xff]
        %v977 = vld [vmem:[%s565 + $0x48] sm:$0xff]
        %v978 = vld [vmem:[%s565 + $0x50] sm:$0xff]
        %v979 = vld [vmem:[%s565 + $0x58] sm:$0xff]
        %v980 = vld [vmem:[%s565 + $0x60] sm:$0xff]
        %v981 = vld [vmem:[%s565 + $0x68] sm:$0xff]
        %v982 = vld [vmem:[%s565 + $0x70] sm:$0xff]
        %v983 = vld [vmem:[%s565 + $0x78] sm:$0xff]
        %v984 = vld [vmem:[%s565 + $0x80] sm:$0xff]
        %v985 = vld [vmem:[%s565 + $0x88] sm:$0xff]
        %v986 = vld [vmem:[%s565 + $0x90] sm:$0xff]
        %v987 = vld [vmem:[%s565 + $0x98] sm:$0xff]
        %v988 = vld [vmem:[%s565 + $0xa0] sm:$0xff]
        %v989 = vld [vmem:[%s565 + $0xa8] sm:$0xff]
        %v990 = vld [vmem:[%s565 + $0xb0] sm:$0xff]
        %v991 = vld [vmem:[%s565 + $0xb8] sm:$0xff]
        %v992 = vld [vmem:[%s565 + $0xc0] sm:$0xff]
        %v993 = vld [vmem:[%s565 + $0xc8] sm:$0xff]
        %v994 = vld [vmem:[%s565 + $0xd0] sm:$0xff]
        %v995 = vld [vmem:[%s565 + $0xd8] sm:$0xff]
        %v996 = vld [vmem:[%s565 + $0xe0] sm:$0xff]
        %v997 = vld [vmem:[%s565 + $0xe8] sm:$0xff]
        %v998 = vld [vmem:[%s565 + $0xf0] sm:$0xff]
        %v999 = vld [vmem:[%s565 + $0xf8] sm:$0xff]
        %v1032 = vunpack.c.l.b16 %v968
        %v1033 = vunpack.c.h.b16 %v968
        %v1034 = vunpack.c.l.b16 %v969
        %v1035 = vunpack.c.h.b16 %v969
        %v1036 = vunpack.c.l.b16 %v970
        %v1037 = vunpack.c.h.b16 %v970
        %v1038 = vunpack.c.l.b16 %v971
        %v1039 = vunpack.c.h.b16 %v971
        %v1040 = vunpack.c.l.b16 %v972
        %v1041 = vunpack.c.h.b16 %v972
        %v1042 = vunpack.c.l.b16 %v973
        %v1043 = vunpack.c.h.b16 %v973
        %v1044 = vunpack.c.l.b16 %v974
        %v1045 = vunpack.c.h.b16 %v974
        %v1046 = vunpack.c.l.b16 %v975
        %v1047 = vunpack.c.h.b16 %v975
        %v1048 = vunpack.c.l.b16 %v976
        %v1049 = vunpack.c.h.b16 %v976
        %v1050 = vunpack.c.l.b16 %v977
        %v1051 = vunpack.c.h.b16 %v977
        %v1052 = vunpack.c.l.b16 %v978
        %v1053 = vunpack.c.h.b16 %v978
        %v1054 = vunpack.c.l.b16 %v979
        %v1055 = vunpack.c.h.b16 %v979
        %v1056 = vunpack.c.l.b16 %v980
        %v1057 = vunpack.c.h.b16 %v980
        %v1058 = vunpack.c.l.b16 %v981
        %v1059 = vunpack.c.h.b16 %v981
        %v1060 = vunpack.c.l.b16 %v982
        %v1061 = vunpack.c.h.b16 %v982
        %v1062 = vunpack.c.l.b16 %v983
        %v1063 = vunpack.c.h.b16 %v983
        %v1064 = vunpack.c.l.b16 %v984
        %v1065 = vunpack.c.h.b16 %v984
        %v1066 = vunpack.c.l.b16 %v985
        %v1067 = vunpack.c.h.b16 %v985
        %v1068 = vunpack.c.l.b16 %v986
        %v1069 = vunpack.c.h.b16 %v986
        %v1070 = vunpack.c.l.b16 %v987
        %v1071 = vunpack.c.h.b16 %v987
        %v1072 = vunpack.c.l.b16 %v988
        %v1073 = vunpack.c.h.b16 %v988
        %v1074 = vunpack.c.l.b16 %v989
        %v1075 = vunpack.c.h.b16 %v989
        %v1076 = vunpack.c.l.b16 %v990
        %v1077 = vunpack.c.h.b16 %v990
        %v1078 = vunpack.c.l.b16 %v991
        %v1079 = vunpack.c.h.b16 %v991
        %v1080 = vunpack.c.l.b16 %v992
        %v1081 = vunpack.c.h.b16 %v992
        %v1082 = vunpack.c.l.b16 %v993
        %v1083 = vunpack.c.h.b16 %v993
        %v1084 = vunpack.c.l.b16 %v994
        %v1085 = vunpack.c.h.b16 %v994
        %v1086 = vunpack.c.l.b16 %v995
        %v1087 = vunpack.c.h.b16 %v995
        %v1088 = vunpack.c.l.b16 %v996
        %v1089 = vunpack.c.h.b16 %v996
        %v1090 = vunpack.c.l.b16 %v997
        %v1091 = vunpack.c.h.b16 %v997
        %v1092 = vunpack.c.l.b16 %v998
        %v1093 = vunpack.c.h.b16 %v998
        %v1094 = vunpack.c.l.b16 %v999
        %v1095 = vunpack.c.h.b16 %v999
        %v1096 = vpack.c.b16 %v1036, %v1032
        %v1097 = vpack.c.b16 %v1037, %v1033
        %v1098 = vpack.c.b16 %v1038, %v1034
        %v1099 = vpack.c.b16 %v1039, %v1035
        %v1100 = vpack.c.b16 %v1044, %v1040
        %v1101 = vpack.c.b16 %v1045, %v1041
        %v1102 = vpack.c.b16 %v1046, %v1042
        %v1103 = vpack.c.b16 %v1047, %v1043
        %v1104 = vpack.c.b16 %v1052, %v1048
        %v1105 = vpack.c.b16 %v1053, %v1049
        %v1106 = vpack.c.b16 %v1054, %v1050
        %v1107 = vpack.c.b16 %v1055, %v1051
        %v1108 = vpack.c.b16 %v1060, %v1056
        %v1109 = vpack.c.b16 %v1061, %v1057
        %v1110 = vpack.c.b16 %v1062, %v1058
        %v1111 = vpack.c.b16 %v1063, %v1059
        %v1112 = vpack.c.b16 %v1068, %v1064
        %v1113 = vpack.c.b16 %v1069, %v1065
        %v1114 = vpack.c.b16 %v1070, %v1066
        %v1115 = vpack.c.b16 %v1071, %v1067
        %v1116 = vpack.c.b16 %v1076, %v1072
        %v1117 = vpack.c.b16 %v1077, %v1073
        %v1118 = vpack.c.b16 %v1078, %v1074
        %v1119 = vpack.c.b16 %v1079, %v1075
        %v1120 = vpack.c.b16 %v1084, %v1080
        %v1121 = vpack.c.b16 %v1085, %v1081
        %v1122 = vpack.c.b16 %v1086, %v1082
        %v1123 = vpack.c.b16 %v1087, %v1083
        %v1124 = vpack.c.b16 %v1092, %v1088
        %v1125 = vpack.c.b16 %v1093, %v1089
        %v1126 = vpack.c.b16 %v1094, %v1090
        %v1127 = vpack.c.b16 %v1095, %v1091
        %1160 = vmatpush.bf16.msra.mxu0 %v1124
        %1161 = vmatpush.bf16.msra.mxu0 %v1120
        %1162 = vmatpush.bf16.msra.mxu0 %v1116
        %1163 = vmatpush.bf16.msra.mxu0 %v1112
        %1164 = vmatpush.bf16.msra.mxu0 %v1108
        %1165 = vmatpush.bf16.msra.mxu0 %v1104
        %1166 = vmatpush.bf16.msra.mxu0 %v1100
        %1167 = vmatpush.bf16.msra.mxu0 %v1096
        %1168 = vmatmul.bf16.gmra.mxu0 %v711
        %v1169 = vpop.f32.mrf.mxu0
        %v1170 = vadd.f32 0.0, %v1169
        %v1171 = vpop.f32.mrf.mxu0
        %v1172 = vadd.f32 0.0, %v1171
        %1173 = vdwg.mxu0
        %1174 = vmatpush.bf16.msra.mxu0 %v1125
        %1175 = vmatpush.bf16.msra.mxu0 %v1121
        %1176 = vmatpush.bf16.msra.mxu0 %v1117
        %1177 = vmatpush.bf16.msra.mxu0 %v1113
        %1178 = vmatpush.bf16.msra.mxu0 %v1109
        %1179 = vmatpush.bf16.msra.mxu0 %v1105
        %1180 = vmatpush.bf16.msra.mxu0 %v1101
        %1181 = vmatpush.bf16.msra.mxu0 %v1097
        %1182 = vmatmul.bf16.gmra.mxu0 %v711
        %v1183 = vpop.f32.mrf.mxu0
        %v1184 = vadd.f32 0.0, %v1183
        %v1185 = vpop.f32.mrf.mxu0
        %v1186 = vadd.f32 0.0, %v1185
        %1187 = vdwg.mxu0
        %1188 = vmatpush.bf16.msra.mxu0 %v1126
        %1189 = vmatpush.bf16.msra.mxu0 %v1122
        %1190 = vmatpush.bf16.msra.mxu0 %v1118
        %1191 = vmatpush.bf16.msra.mxu0 %v1114
        %1192 = vmatpush.bf16.msra.mxu0 %v1110
        %1193 = vmatpush.bf16.msra.mxu0 %v1106
        %1194 = vmatpush.bf16.msra.mxu0 %v1102
        %1195 = vmatpush.bf16.msra.mxu0 %v1098
        %1196 = vmatmul.bf16.gmra.mxu0 %v711
        %v1197 = vpop.f32.mrf.mxu0
        %v1198 = vadd.f32 0.0, %v1197
        %v1199 = vpop.f32.mrf.mxu0
        %v1200 = vadd.f32 0.0, %v1199
        %1201 = vdwg.mxu0
        %1202 = vmatpush.bf16.msra.mxu0 %v1127
        %1203 = vmatpush.bf16.msra.mxu0 %v1123
        %1204 = vmatpush.bf16.msra.mxu0 %v1119
        %1205 = vmatpush.bf16.msra.mxu0 %v1115
        %1206 = vmatpush.bf16.msra.mxu0 %v1111
        %1207 = vmatpush.bf16.msra.mxu0 %v1107
        %1208 = vmatpush.bf16.msra.mxu0 %v1103
        %1209 = vmatpush.bf16.msra.mxu0 %v1099
        %1210 = vmatmul.bf16.gmra.mxu0 %v711
        %v1211 = vpop.f32.mrf.mxu0
        %v1212 = vadd.f32 0.0, %v1211
        %v1213 = vpop.f32.mrf.mxu0
        %v1214 = vadd.f32 0.0, %v1213
        %1215 = vdwg.mxu0
        %v1216 = vld [vmem:[%s575] sm:$0xff]
        %v1217 = vld [vmem:[%s575 + $0x8] sm:$0xff]
        %v1218 = vld [vmem:[%s575 + $0x10] sm:$0xff]
        %v1219 = vld [vmem:[%s575 + $0x18] sm:$0xff]
        %v1220 = vld [vmem:[%s575 + $0x20] sm:$0xff]
        %v1221 = vld [vmem:[%s575 + $0x28] sm:$0xff]
        %v1222 = vld [vmem:[%s575 + $0x30] sm:$0xff]
        %v1223 = vld [vmem:[%s575 + $0x38] sm:$0xff]
        %v1224 = vld [vmem:[%s575 + $0x40] sm:$0xff]
        %v1225 = vld [vmem:[%s575 + $0x48] sm:$0xff]
        %v1226 = vld [vmem:[%s575 + $0x50] sm:$0xff]
        %v1227 = vld [vmem:[%s575 + $0x58] sm:$0xff]
        %v1228 = vld [vmem:[%s575 + $0x60] sm:$0xff]
        %v1229 = vld [vmem:[%s575 + $0x68] sm:$0xff]
        %v1230 = vld [vmem:[%s575 + $0x70] sm:$0xff]
        %v1231 = vld [vmem:[%s575 + $0x78] sm:$0xff]
        %v1232 = vld [vmem:[%s575 + $0x80] sm:$0xff]
        %v1233 = vld [vmem:[%s575 + $0x88] sm:$0xff]
        %v1234 = vld [vmem:[%s575 + $0x90] sm:$0xff]
        %v1235 = vld [vmem:[%s575 + $0x98] sm:$0xff]
        %v1236 = vld [vmem:[%s575 + $0xa0] sm:$0xff]
        %v1237 = vld [vmem:[%s575 + $0xa8] sm:$0xff]
        %v1238 = vld [vmem:[%s575 + $0xb0] sm:$0xff]
        %v1239 = vld [vmem:[%s575 + $0xb8] sm:$0xff]
        %v1240 = vld [vmem:[%s575 + $0xc0] sm:$0xff]
        %v1241 = vld [vmem:[%s575 + $0xc8] sm:$0xff]
        %v1242 = vld [vmem:[%s575 + $0xd0] sm:$0xff]
        %v1243 = vld [vmem:[%s575 + $0xd8] sm:$0xff]
        %v1244 = vld [vmem:[%s575 + $0xe0] sm:$0xff]
        %v1245 = vld [vmem:[%s575 + $0xe8] sm:$0xff]
        %v1246 = vld [vmem:[%s575 + $0xf0] sm:$0xff]
        %v1247 = vld [vmem:[%s575 + $0xf8] sm:$0xff]
        %v1280 = vunpack.c.l.b16 %v1216
        %v1281 = vunpack.c.h.b16 %v1216
        %v1282 = vunpack.c.l.b16 %v1217
        %v1283 = vunpack.c.h.b16 %v1217
        %v1284 = vunpack.c.l.b16 %v1218
        %v1285 = vunpack.c.h.b16 %v1218
        %v1286 = vunpack.c.l.b16 %v1219
        %v1287 = vunpack.c.h.b16 %v1219
        %v1288 = vunpack.c.l.b16 %v1220
        %v1289 = vunpack.c.h.b16 %v1220
        %v1290 = vunpack.c.l.b16 %v1221
        %v1291 = vunpack.c.h.b16 %v1221
        %v1292 = vunpack.c.l.b16 %v1222
        %v1293 = vunpack.c.h.b16 %v1222
        %v1294 = vunpack.c.l.b16 %v1223
        %v1295 = vunpack.c.h.b16 %v1223
        %v1296 = vunpack.c.l.b16 %v1224
        %v1297 = vunpack.c.h.b16 %v1224
        %v1298 = vunpack.c.l.b16 %v1225
        %v1299 = vunpack.c.h.b16 %v1225
        %v1300 = vunpack.c.l.b16 %v1226
        %v1301 = vunpack.c.h.b16 %v1226
        %v1302 = vunpack.c.l.b16 %v1227
        %v1303 = vunpack.c.h.b16 %v1227
        %v1304 = vunpack.c.l.b16 %v1228
        %v1305 = vunpack.c.h.b16 %v1228
        %v1306 = vunpack.c.l.b16 %v1229
        %v1307 = vunpack.c.h.b16 %v1229
        %v1308 = vunpack.c.l.b16 %v1230
        %v1309 = vunpack.c.h.b16 %v1230
        %v1310 = vunpack.c.l.b16 %v1231
        %v1311 = vunpack.c.h.b16 %v1231
        %v1312 = vunpack.c.l.b16 %v1232
        %v1313 = vunpack.c.h.b16 %v1232
        %v1314 = vunpack.c.l.b16 %v1233
        %v1315 = vunpack.c.h.b16 %v1233
        %v1316 = vunpack.c.l.b16 %v1234
        %v1317 = vunpack.c.h.b16 %v1234
        %v1318 = vunpack.c.l.b16 %v1235
        %v1319 = vunpack.c.h.b16 %v1235
        %v1320 = vunpack.c.l.b16 %v1236
        %v1321 = vunpack.c.h.b16 %v1236
        %v1322 = vunpack.c.l.b16 %v1237
        %v1323 = vunpack.c.h.b16 %v1237
        %v1324 = vunpack.c.l.b16 %v1238
        %v1325 = vunpack.c.h.b16 %v1238
        %v1326 = vunpack.c.l.b16 %v1239
        %v1327 = vunpack.c.h.b16 %v1239
        %v1328 = vunpack.c.l.b16 %v1240
        %v1329 = vunpack.c.h.b16 %v1240
        %v1330 = vunpack.c.l.b16 %v1241
        %v1331 = vunpack.c.h.b16 %v1241
        %v1332 = vunpack.c.l.b16 %v1242
        %v1333 = vunpack.c.h.b16 %v1242
        %v1334 = vunpack.c.l.b16 %v1243
        %v1335 = vunpack.c.h.b16 %v1243
        %v1336 = vunpack.c.l.b16 %v1244
        %v1337 = vunpack.c.h.b16 %v1244
        %v1338 = vunpack.c.l.b16 %v1245
        %v1339 = vunpack.c.h.b16 %v1245
        %v1340 = vunpack.c.l.b16 %v1246
        %v1341 = vunpack.c.h.b16 %v1246
        %v1342 = vunpack.c.l.b16 %v1247
        %v1343 = vunpack.c.h.b16 %v1247
        %v1344 = vpack.c.b16 %v1284, %v1280
        %v1345 = vpack.c.b16 %v1285, %v1281
        %v1346 = vpack.c.b16 %v1286, %v1282
        %v1347 = vpack.c.b16 %v1287, %v1283
        %v1348 = vpack.c.b16 %v1292, %v1288
        %v1349 = vpack.c.b16 %v1293, %v1289
        %v1350 = vpack.c.b16 %v1294, %v1290
        %v1351 = vpack.c.b16 %v1295, %v1291
        %v1352 = vpack.c.b16 %v1300, %v1296
        %v1353 = vpack.c.b16 %v1301, %v1297
        %v1354 = vpack.c.b16 %v1302, %v1298
        %v1355 = vpack.c.b16 %v1303, %v1299
        %v1356 = vpack.c.b16 %v1308, %v1304
        %v1357 = vpack.c.b16 %v1309, %v1305
        %v1358 = vpack.c.b16 %v1310, %v1306
        %v1359 = vpack.c.b16 %v1311, %v1307
        %v1360 = vpack.c.b16 %v1316, %v1312
        %v1361 = vpack.c.b16 %v1317, %v1313
        %v1362 = vpack.c.b16 %v1318, %v1314
        %v1363 = vpack.c.b16 %v1319, %v1315
        %v1364 = vpack.c.b16 %v1324, %v1320
        %v1365 = vpack.c.b16 %v1325, %v1321
        %v1366 = vpack.c.b16 %v1326, %v1322
        %v1367 = vpack.c.b16 %v1327, %v1323
        %v1368 = vpack.c.b16 %v1332, %v1328
        %v1369 = vpack.c.b16 %v1333, %v1329
        %v1370 = vpack.c.b16 %v1334, %v1330
        %v1371 = vpack.c.b16 %v1335, %v1331
        %v1372 = vpack.c.b16 %v1340, %v1336
        %v1373 = vpack.c.b16 %v1341, %v1337
        %v1374 = vpack.c.b16 %v1342, %v1338
        %v1375 = vpack.c.b16 %v1343, %v1339
        %1408 = vmatpush.bf16.msra.mxu0 %v1372
        %1409 = vmatpush.bf16.msra.mxu0 %v1368
        %1410 = vmatpush.bf16.msra.mxu0 %v1364
        %1411 = vmatpush.bf16.msra.mxu0 %v1360
        %1412 = vmatpush.bf16.msra.mxu0 %v1356
        %1413 = vmatpush.bf16.msra.mxu0 %v1352
        %1414 = vmatpush.bf16.msra.mxu0 %v1348
        %1415 = vmatpush.bf16.msra.mxu0 %v1344
        %1416 = vmatmul.bf16.gmra.mxu0 %v711
        %v1417 = vpop.f32.mrf.mxu0
        %v1418 = vadd.f32 0.0, %v1417
        %v1419 = vpop.f32.mrf.mxu0
        %v1420 = vadd.f32 0.0, %v1419
        %1421 = vdwg.mxu0
        %1422 = vmatpush.bf16.msra.mxu0 %v1373
        %1423 = vmatpush.bf16.msra.mxu0 %v1369
        %1424 = vmatpush.bf16.msra.mxu0 %v1365
        %1425 = vmatpush.bf16.msra.mxu0 %v1361
        %1426 = vmatpush.bf16.msra.mxu0 %v1357
        %1427 = vmatpush.bf16.msra.mxu0 %v1353
        %1428 = vmatpush.bf16.msra.mxu0 %v1349
        %1429 = vmatpush.bf16.msra.mxu0 %v1345
        %1430 = vmatmul.bf16.gmra.mxu0 %v711
        %v1431 = vpop.f32.mrf.mxu0
        %v1432 = vadd.f32 0.0, %v1431
        %v1433 = vpop.f32.mrf.mxu0
        %v1434 = vadd.f32 0.0, %v1433
        %1435 = vdwg.mxu0
        %1436 = vmatpush.bf16.msra.mxu0 %v1374
        %1437 = vmatpush.bf16.msra.mxu0 %v1370
        %1438 = vmatpush.bf16.msra.mxu0 %v1366
        %1439 = vmatpush.bf16.msra.mxu0 %v1362
        %1440 = vmatpush.bf16.msra.mxu0 %v1358
        %1441 = vmatpush.bf16.msra.mxu0 %v1354
        %1442 = vmatpush.bf16.msra.mxu0 %v1350
        %1443 = vmatpush.bf16.msra.mxu0 %v1346
        %1444 = vmatmul.bf16.gmra.mxu0 %v711
        %v1445 = vpop.f32.mrf.mxu0
        %v1446 = vadd.f32 0.0, %v1445
        %v1447 = vpop.f32.mrf.mxu0
        %v1448 = vadd.f32 0.0, %v1447
        %1449 = vdwg.mxu0
        %1450 = vmatpush.bf16.msra.mxu0 %v1375
        %1451 = vmatpush.bf16.msra.mxu0 %v1371
        %1452 = vmatpush.bf16.msra.mxu0 %v1367
        %1453 = vmatpush.bf16.msra.mxu0 %v1363
        %1454 = vmatpush.bf16.msra.mxu0 %v1359
        %1455 = vmatpush.bf16.msra.mxu0 %v1355
        %1456 = vmatpush.bf16.msra.mxu0 %v1351
        %1457 = vmatpush.bf16.msra.mxu0 %v1347
        %1458 = vmatmul.bf16.gmra.mxu0 %v711
        %v1459 = vpop.f32.mrf.mxu0
        %v1460 = vadd.f32 0.0, %v1459
        %v1461 = vpop.f32.mrf.mxu0
        %v1462 = vadd.f32 0.0, %v1461
        %1463 = vdwg.mxu0
        %v1464 = vpack.c.bf16 %v960, %v960
        %v1465 = vpack.c.bf16 %v964, %v964
        %v1466 = vpack.c.bf16 %v1170, %v1170
        %v1467 = vpack.c.bf16 %v1172, %v1172
        %v1468 = vpack.c.bf16 %v1418, %v1418
        %v1469 = vpack.c.bf16 %v1420, %v1420
        %1470 = vmatpush.bf16.xpose.msra.mxu0 0
        %1471 = vmatpush.bf16.xpose.msra.mxu0 0
        %1472 = vmatpush.bf16.xpose.msra.mxu0 0
        %1473 = vmatpush.bf16.xpose.msra.mxu0 0
        %1474 = vmatpush.bf16.xpose.msra.mxu0 0
        %1475 = vmatpush.bf16.xpose.msra.mxu0 0
        %1476 = vmatpush.bf16.xpose.msra.mxu0 0
        %1477 = vmatpush.bf16.xpose.msra.mxu0 %v1466
        %1478 = vmatmul.bf16.gmra.mxu0 %v1464
        %v1479 = vpop.f32.mrf.mxu0
        %v1480 = vadd.f32 0.0, %v1479
        %v1481 = vpop.f32.mrf.mxu0
        %1482 = vdwg.mxu0
        %1483 = vmatpush.bf16.xpose.msra.mxu0 0
        %1484 = vmatpush.bf16.xpose.msra.mxu0 0
        %1485 = vmatpush.bf16.xpose.msra.mxu0 0
        %1486 = vmatpush.bf16.xpose.msra.mxu0 0
        %1487 = vmatpush.bf16.xpose.msra.mxu0 0
        %1488 = vmatpush.bf16.xpose.msra.mxu0 0
        %1489 = vmatpush.bf16.xpose.msra.mxu0 0
        %1490 = vmatpush.bf16.xpose.msra.mxu0 %v1467
        %1491 = vmatmul.bf16.gmra.mxu0 %v1465
        %v1492 = vpop.f32.mrf.mxu0
        %v1493 = vadd.f32 0.0, %v1492
        %v1494 = vpop.f32.mrf.mxu0
        %1495 = vdwg.mxu0
        %vm1496 = vcmask 64512
        %v1497 = vsel %vm1496, %v1480, -inf
        %1498 = vmax.xlane.f32.xlu0 %v1497
        %v1499 = vpop.xlane.xlu0 %1498
        %v1500 = vsel %vm1496, %v1493, -inf
        %1501 = vmax.xlane.f32.xlu0 %v1500
        %v1502 = vpop.xlane.xlu0 %1501
        %v1503 = vsub.f32 %v1480, %v1499
        %v1504 = vsub.f32 %v1493, %v1502
        %v1505 = vmul.f32 %v1503, 1.442695
        %v1506 = vpow.pop %v1505
        %v1507 = vmul.f32 %v1504, 1.442695
        %v1508 = vpow.pop %v1507
        %v1509 = vsel %vm1496, %v1506, 0.0
        %1510 = vadd.xlane.f32.xlu0 %v1509
        %v1511 = vpop.xlane.xlu0 %1510
        %v1512 = vsel %vm1496, %v1508, 0.0
        %1513 = vadd.xlane.f32.xlu0 %v1512
        %v1514 = vpop.xlane.xlu0 %1513
        %v1515 = vrcp.pop %v1511
        %v1516 = vrcp.pop %v1514
        %v1517 = vmul.f32 %v1506, %v1515
        %v1518 = vmul.f32 %v1508, %v1516
        %v1519 = vpack.c.bf16 %v1517, %v1517
        %v1520 = vpack.c.bf16 %v1518, %v1518
        %v1522 = vsel %vm1496, %v1519, 0
        %vm1524 = vcmask 1043456
        %v1526 = vsel %vm1524, %v1468, 0
        %1528 = vmatpush.bf16.msra.mxu0 0
        %1529 = vmatpush.bf16.msra.mxu0 0
        %1530 = vmatpush.bf16.msra.mxu0 0
        %1531 = vmatpush.bf16.msra.mxu0 0
        %1532 = vmatpush.bf16.msra.mxu0 0
        %1533 = vmatpush.bf16.msra.mxu0 0
        %1534 = vmatpush.bf16.msra.mxu0 0
        %1535 = vmatpush.bf16.msra.mxu0 %v1526
        %1536 = vmatmul.bf16.gmra.mxu0 %v1522
        %v1537 = vpop.f32.mrf.mxu0
        %v1538 = vadd.f32 0.0, %v1537
        %v1539 = vpop.f32.mrf.mxu0
        %1540 = vdwg.mxu0
        %v1542 = vsel %vm1496, %v1520, 0
        %v1545 = vsel %vm1524, %v1469, 0
        %1547 = vmatpush.bf16.msra.mxu0 0
        %1548 = vmatpush.bf16.msra.mxu0 0
        %1549 = vmatpush.bf16.msra.mxu0 0
        %1550 = vmatpush.bf16.msra.mxu0 0
        %1551 = vmatpush.bf16.msra.mxu0 0
        %1552 = vmatpush.bf16.msra.mxu0 0
        %1553 = vmatpush.bf16.msra.mxu0 0
        %1554 = vmatpush.bf16.msra.mxu0 %v1545
        %1555 = vmatmul.bf16.gmra.mxu0 %v1542
        %v1556 = vpop.f32.mrf.mxu0
        %v1557 = vadd.f32 0.0, %v1556
        %v1558 = vpop.f32.mrf.mxu0
        %1559 = vdwg.mxu0
        %v1560 = vpack.c.bf16 %v961, %v961
        %v1561 = vpack.c.bf16 %v965, %v965
        %v1562 = vpack.c.bf16 %v1184, %v1184
        %v1563 = vpack.c.bf16 %v1186, %v1186
        %v1564 = vpack.c.bf16 %v1432, %v1432
        %v1565 = vpack.c.bf16 %v1434, %v1434
        %1566 = vmatpush.bf16.xpose.msra.mxu0 0
        %1567 = vmatpush.bf16.xpose.msra.mxu0 0
        %1568 = vmatpush.bf16.xpose.msra.mxu0 0
        %1569 = vmatpush.bf16.xpose.msra.mxu0 0
        %1570 = vmatpush.bf16.xpose.msra.mxu0 0
        %1571 = vmatpush.bf16.xpose.msra.mxu0 0
        %1572 = vmatpush.bf16.xpose.msra.mxu0 0
        %1573 = vmatpush.bf16.xpose.msra.mxu0 %v1562
        %1574 = vmatmul.bf16.gmra.mxu0 %v1560
        %v1575 = vpop.f32.mrf.mxu0
        %v1576 = vadd.f32 0.0, %v1575
        %v1577 = vpop.f32.mrf.mxu0
        %1578 = vdwg.mxu0
        %1579 = vmatpush.bf16.xpose.msra.mxu0 0
        %1580 = vmatpush.bf16.xpose.msra.mxu0 0
        %1581 = vmatpush.bf16.xpose.msra.mxu0 0
        %1582 = vmatpush.bf16.xpose.msra.mxu0 0
        %1583 = vmatpush.bf16.xpose.msra.mxu0 0
        %1584 = vmatpush.bf16.xpose.msra.mxu0 0
        %1585 = vmatpush.bf16.xpose.msra.mxu0 0
        %1586 = vmatpush.bf16.xpose.msra.mxu0 %v1563
        %1587 = vmatmul.bf16.gmra.mxu0 %v1561
        %v1588 = vpop.f32.mrf.mxu0
        %v1589 = vadd.f32 0.0, %v1588
        %v1590 = vpop.f32.mrf.mxu0
        %1591 = vdwg.mxu0
        %v1592 = vsel %vm1496, %v1576, -inf
        %1593 = vmax.xlane.f32.xlu0 %v1592
        %v1594 = vpop.xlane.xlu0 %1593
        %v1595 = vsel %vm1496, %v1589, -inf
        %1596 = vmax.xlane.f32.xlu0 %v1595
        %v1597 = vpop.xlane.xlu0 %1596
        %v1598 = vsub.f32 %v1576, %v1594
        %v1599 = vsub.f32 %v1589, %v1597
        %v1600 = vmul.f32 %v1598, 1.442695
        %v1601 = vpow.pop %v1600
        %v1602 = vmul.f32 %v1599, 1.442695
        %v1603 = vpow.pop %v1602
        %v1604 = vsel %vm1496, %v1601, 0.0
        %1605 = vadd.xlane.f32.xlu0 %v1604
        %v1606 = vpop.xlane.xlu0 %1605
        %v1607 = vsel %vm1496, %v1603, 0.0
        %1608 = vadd.xlane.f32.xlu0 %v1607
        %v1609 = vpop.xlane.xlu0 %1608
        %v1610 = vrcp.pop %v1606
        %v1611 = vrcp.pop %v1609
        %v1612 = vmul.f32 %v1601, %v1610
        %v1613 = vmul.f32 %v1603, %v1611
        %v1614 = vpack.c.bf16 %v1612, %v1612
        %v1615 = vpack.c.bf16 %v1613, %v1613
        %v1617 = vsel %vm1496, %v1614, 0
        %v1620 = vsel %vm1524, %v1564, 0
        %1622 = vmatpush.bf16.msra.mxu0 0
        %1623 = vmatpush.bf16.msra.mxu0 0
        %1624 = vmatpush.bf16.msra.mxu0 0
        %1625 = vmatpush.bf16.msra.mxu0 0
        %1626 = vmatpush.bf16.msra.mxu0 0
        %1627 = vmatpush.bf16.msra.mxu0 0
        %1628 = vmatpush.bf16.msra.mxu0 0
        %1629 = vmatpush.bf16.msra.mxu0 %v1620
        %1630 = vmatmul.bf16.gmra.mxu0 %v1617
        %v1631 = vpop.f32.mrf.mxu0
        %v1632 = vadd.f32 0.0, %v1631
        %v1633 = vpop.f32.mrf.mxu0
        %1634 = vdwg.mxu0
        %v1636 = vsel %vm1496, %v1615, 0
        %v1639 = vsel %vm1524, %v1565, 0
        %1641 = vmatpush.bf16.msra.mxu0 0
        %1642 = vmatpush.bf16.msra.mxu0 0
        %1643 = vmatpush.bf16.msra.mxu0 0
        %1644 = vmatpush.bf16.msra.mxu0 0
        %1645 = vmatpush.bf16.msra.mxu0 0
        %1646 = vmatpush.bf16.msra.mxu0 0
        %1647 = vmatpush.bf16.msra.mxu0 0
        %1648 = vmatpush.bf16.msra.mxu0 %v1639
        %1649 = vmatmul.bf16.gmra.mxu0 %v1636
        %v1650 = vpop.f32.mrf.mxu0
        %v1651 = vadd.f32 0.0, %v1650
        %v1652 = vpop.f32.mrf.mxu0
        %1653 = vdwg.mxu0
        %v1654 = vpack.c.bf16 %v962, %v962
        %v1655 = vpack.c.bf16 %v966, %v966
        %v1656 = vpack.c.bf16 %v1198, %v1198
        %v1657 = vpack.c.bf16 %v1200, %v1200
        %v1658 = vpack.c.bf16 %v1446, %v1446
        %v1659 = vpack.c.bf16 %v1448, %v1448
        %1660 = vmatpush.bf16.xpose.msra.mxu0 0
        %1661 = vmatpush.bf16.xpose.msra.mxu0 0
        %1662 = vmatpush.bf16.xpose.msra.mxu0 0
        %1663 = vmatpush.bf16.xpose.msra.mxu0 0
        %1664 = vmatpush.bf16.xpose.msra.mxu0 0
        %1665 = vmatpush.bf16.xpose.msra.mxu0 0
        %1666 = vmatpush.bf16.xpose.msra.mxu0 0
        %1667 = vmatpush.bf16.xpose.msra.mxu0 %v1656
        %1668 = vmatmul.bf16.gmra.mxu0 %v1654
        %v1669 = vpop.f32.mrf.mxu0
        %v1670 = vadd.f32 0.0, %v1669
        %v1671 = vpop.f32.mrf.mxu0
        %1672 = vdwg.mxu0
        %1673 = vmatpush.bf16.xpose.msra.mxu0 0
        %1674 = vmatpush.bf16.xpose.msra.mxu0 0
        %1675 = vmatpush.bf16.xpose.msra.mxu0 0
        %1676 = vmatpush.bf16.xpose.msra.mxu0 0
        %1677 = vmatpush.bf16.xpose.msra.mxu0 0
        %1678 = vmatpush.bf16.xpose.msra.mxu0 0
        %1679 = vmatpush.bf16.xpose.msra.mxu0 0
        %1680 = vmatpush.bf16.xpose.msra.mxu0 %v1657
        %1681 = vmatmul.bf16.gmra.mxu0 %v1655
        %v1682 = vpop.f32.mrf.mxu0
        %v1683 = vadd.f32 0.0, %v1682
        %v1684 = vpop.f32.mrf.mxu0
        %1685 = vdwg.mxu0
        %v1686 = vsel %vm1496, %v1670, -inf
        %1687 = vmax.xlane.f32.xlu0 %v1686
        %v1688 = vpop.xlane.xlu0 %1687
        %v1689 = vsel %vm1496, %v1683, -inf
        %1690 = vmax.xlane.f32.xlu0 %v1689
        %v1691 = vpop.xlane.xlu0 %1690
        %v1692 = vsub.f32 %v1670, %v1688
        %v1693 = vsub.f32 %v1683, %v1691
        %v1694 = vmul.f32 %v1692, 1.442695
        %v1695 = vpow.pop %v1694
        %v1696 = vmul.f32 %v1693, 1.442695
        %v1697 = vpow.pop %v1696
        %v1698 = vsel %vm1496, %v1695, 0.0
        %1699 = vadd.xlane.f32.xlu0 %v1698
        %v1700 = vpop.xlane.xlu0 %1699
        %v1701 = vsel %vm1496, %v1697, 0.0
        %1702 = vadd.xlane.f32.xlu0 %v1701
        %v1703 = vpop.xlane.xlu0 %1702
        %v1704 = vrcp.pop %v1700
        %v1705 = vrcp.pop %v1703
        %v1706 = vmul.f32 %v1695, %v1704
        %v1707 = vmul.f32 %v1697, %v1705
        %v1708 = vpack.c.bf16 %v1706, %v1706
        %v1709 = vpack.c.bf16 %v1707, %v1707
        %v1711 = vsel %vm1496, %v1708, 0
        %v1714 = vsel %vm1524, %v1658, 0
        %1716 = vmatpush.bf16.msra.mxu0 0
        %1717 = vmatpush.bf16.msra.mxu0 0
        %1718 = vmatpush.bf16.msra.mxu0 0
        %1719 = vmatpush.bf16.msra.mxu0 0
        %1720 = vmatpush.bf16.msra.mxu0 0
        %1721 = vmatpush.bf16.msra.mxu0 0
        %1722 = vmatpush.bf16.msra.mxu0 0
        %1723 = vmatpush.bf16.msra.mxu0 %v1714
        %1724 = vmatmul.bf16.gmra.mxu0 %v1711
        %v1725 = vpop.f32.mrf.mxu0
        %v1726 = vadd.f32 0.0, %v1725
        %v1727 = vpop.f32.mrf.mxu0
        %1728 = vdwg.mxu0
        %v1730 = vsel %vm1496, %v1709, 0
        %v1733 = vsel %vm1524, %v1659, 0
        %1735 = vmatpush.bf16.msra.mxu0 0
        %1736 = vmatpush.bf16.msra.mxu0 0
        %1737 = vmatpush.bf16.msra.mxu0 0
        %1738 = vmatpush.bf16.msra.mxu0 0
        %1739 = vmatpush.bf16.msra.mxu0 0
        %1740 = vmatpush.bf16.msra.mxu0 0
        %1741 = vmatpush.bf16.msra.mxu0 0
        %1742 = vmatpush.bf16.msra.mxu0 %v1733
        %1743 = vmatmul.bf16.gmra.mxu0 %v1730
        %v1744 = vpop.f32.mrf.mxu0
        %v1745 = vadd.f32 0.0, %v1744
        %v1746 = vpop.f32.mrf.mxu0
        %1747 = vdwg.mxu0
        %v1748 = vpack.c.bf16 %v963, %v963
        %v1749 = vpack.c.bf16 %v967, %v967
        %v1750 = vpack.c.bf16 %v1212, %v1212
        %v1751 = vpack.c.bf16 %v1214, %v1214
        %v1752 = vpack.c.bf16 %v1460, %v1460
        %v1753 = vpack.c.bf16 %v1462, %v1462
        %1754 = vmatpush.bf16.xpose.msra.mxu0 0
        %1755 = vmatpush.bf16.xpose.msra.mxu0 0
        %1756 = vmatpush.bf16.xpose.msra.mxu0 0
        %1757 = vmatpush.bf16.xpose.msra.mxu0 0
        %1758 = vmatpush.bf16.xpose.msra.mxu0 0
        %1759 = vmatpush.bf16.xpose.msra.mxu0 0
        %1760 = vmatpush.bf16.xpose.msra.mxu0 0
        %1761 = vmatpush.bf16.xpose.msra.mxu0 %v1750
        %1762 = vmatmul.bf16.gmra.mxu0 %v1748
        %v1763 = vpop.f32.mrf.mxu0
        %v1764 = vadd.f32 0.0, %v1763
        %v1765 = vpop.f32.mrf.mxu0
        %1766 = vdwg.mxu0
        %1767 = vmatpush.bf16.xpose.msra.mxu0 0
        %1768 = vmatpush.bf16.xpose.msra.mxu0 0
        %1769 = vmatpush.bf16.xpose.msra.mxu0 0
        %1770 = vmatpush.bf16.xpose.msra.mxu0 0
        %1771 = vmatpush.bf16.xpose.msra.mxu0 0
        %1772 = vmatpush.bf16.xpose.msra.mxu0 0
        %1773 = vmatpush.bf16.xpose.msra.mxu0 0
        %1774 = vmatpush.bf16.xpose.msra.mxu0 %v1751
        %1775 = vmatmul.bf16.gmra.mxu0 %v1749
        %v1776 = vpop.f32.mrf.mxu0
        %v1777 = vadd.f32 0.0, %v1776
        %v1778 = vpop.f32.mrf.mxu0
        %1779 = vdwg.mxu0
        %v1780 = vsel %vm1496, %v1764, -inf
        %1781 = vmax.xlane.f32.xlu0 %v1780
        %v1782 = vpop.xlane.xlu0 %1781
        %v1783 = vsel %vm1496, %v1777, -inf
        %1784 = vmax.xlane.f32.xlu0 %v1783
        %v1785 = vpop.xlane.xlu0 %1784
        %v1786 = vsub.f32 %v1764, %v1782
        %v1787 = vsub.f32 %v1777, %v1785
        %v1788 = vmul.f32 %v1786, 1.442695
        %v1789 = vpow.pop %v1788
        %v1790 = vmul.f32 %v1787, 1.442695
        %v1791 = vpow.pop %v1790
        %v1792 = vsel %vm1496, %v1789, 0.0
        %1793 = vadd.xlane.f32.xlu0 %v1792
        %v1794 = vpop.xlane.xlu0 %1793
        %v1795 = vsel %vm1496, %v1791, 0.0
        %1796 = vadd.xlane.f32.xlu0 %v1795
        %v1797 = vpop.xlane.xlu0 %1796
        %v1798 = vrcp.pop %v1794
        %v1799 = vrcp.pop %v1797
        %v1800 = vmul.f32 %v1789, %v1798
        %v1801 = vmul.f32 %v1791, %v1799
        %v1802 = vpack.c.bf16 %v1800, %v1800
        %v1803 = vpack.c.bf16 %v1801, %v1801
        %v1805 = vsel %vm1496, %v1802, 0
        %v1808 = vsel %vm1524, %v1752, 0
        %1810 = vmatpush.bf16.msra.mxu0 0
        %1811 = vmatpush.bf16.msra.mxu0 0
        %1812 = vmatpush.bf16.msra.mxu0 0
        %1813 = vmatpush.bf16.msra.mxu0 0
        %1814 = vmatpush.bf16.msra.mxu0 0
        %1815 = vmatpush.bf16.msra.mxu0 0
        %1816 = vmatpush.bf16.msra.mxu0 0
        %1817 = vmatpush.bf16.msra.mxu0 %v1808
        %1818 = vmatmul.bf16.gmra.mxu0 %v1805
        %v1819 = vpop.f32.mrf.mxu0
        %v1820 = vadd.f32 0.0, %v1819
        %v1821 = vpop.f32.mrf.mxu0
        %1822 = vdwg.mxu0
        %v1824 = vsel %vm1496, %v1803, 0
        %v1827 = vsel %vm1524, %v1753, 0
        %1829 = vmatpush.bf16.msra.mxu0 0
        %1830 = vmatpush.bf16.msra.mxu0 0
        %1831 = vmatpush.bf16.msra.mxu0 0
        %1832 = vmatpush.bf16.msra.mxu0 0
        %1833 = vmatpush.bf16.msra.mxu0 0
        %1834 = vmatpush.bf16.msra.mxu0 0
        %1835 = vmatpush.bf16.msra.mxu0 0
        %1836 = vmatpush.bf16.msra.mxu0 %v1827
        %1837 = vmatmul.bf16.gmra.mxu0 %v1824
        %v1838 = vpop.f32.mrf.mxu0
        %v1839 = vadd.f32 0.0, %v1838
        %v1840 = vpop.f32.mrf.mxu0
        %1841 = vdwg.mxu0
        %v1842 = vpack.c.bf16 %v1557, %v1538
        %v1843 = vpack.c.bf16 %v1651, %v1632
        %v1844 = vpack.c.bf16 %v1745, %v1726
        %v1845 = vpack.c.bf16 %v1839, %v1820
        %v1846 = vld [vmem:[%s585] sm:$0xf]
        %v1847 = vld [vmem:[%s585 + $0x4] sm:$0xf]
        %v1848 = vld [vmem:[%s585 + $0x8] sm:$0xf]
        %v1849 = vld [vmem:[%s585 + $0xc] sm:$0xf]
        %v1850 = vld [vmem:[%s585 + $0x10] sm:$0xf]
        %v1851 = vld [vmem:[%s585 + $0x14] sm:$0xf]
        %v1852 = vld [vmem:[%s585 + $0x18] sm:$0xf]
        %v1853 = vld [vmem:[%s585 + $0x1c] sm:$0xf]
        %v1854 = vld [vmem:[%s585 + $0x20] sm:$0xf]
        %v1855 = vld [vmem:[%s585 + $0x24] sm:$0xf]
        %v1856 = vld [vmem:[%s585 + $0x28] sm:$0xf]
        %v1857 = vld [vmem:[%s585 + $0x2c] sm:$0xf]
        %v1858 = vld [vmem:[%s585 + $0x30] sm:$0xf]
        %v1859 = vld [vmem:[%s585 + $0x34] sm:$0xf]
        %v1860 = vld [vmem:[%s585 + $0x38] sm:$0xf]
        %v1861 = vld [vmem:[%s585 + $0x3c] sm:$0xf]
        %v1862 = vld [vmem:[%s585 + $0x40] sm:$0xf]
        %v1863 = vld [vmem:[%s585 + $0x44] sm:$0xf]
        %v1864 = vld [vmem:[%s585 + $0x48] sm:$0xf]
        %v1865 = vld [vmem:[%s585 + $0x4c] sm:$0xf]
        %v1866 = vld [vmem:[%s585 + $0x50] sm:$0xf]
        %v1867 = vld [vmem:[%s585 + $0x54] sm:$0xf]
        %v1868 = vld [vmem:[%s585 + $0x58] sm:$0xf]
        %v1869 = vld [vmem:[%s585 + $0x5c] sm:$0xf]
        %v1870 = vld [vmem:[%s585 + $0x60] sm:$0xf]
        %v1871 = vld [vmem:[%s585 + $0x64] sm:$0xf]
        %v1872 = vld [vmem:[%s585 + $0x68] sm:$0xf]
        %v1873 = vld [vmem:[%s585 + $0x6c] sm:$0xf]
        %v1874 = vld [vmem:[%s585 + $0x70] sm:$0xf]
        %v1875 = vld [vmem:[%s585 + $0x74] sm:$0xf]
        %v1876 = vld [vmem:[%s585 + $0x78] sm:$0xf]
        %v1877 = vld [vmem:[%s585 + $0x7c] sm:$0xf]
        %v1878 = vld [vmem:[%s585 + $0x80] sm:$0xf]
        %v1879 = vld [vmem:[%s585 + $0x84] sm:$0xf]
        %v1880 = vld [vmem:[%s585 + $0x88] sm:$0xf]
        %v1881 = vld [vmem:[%s585 + $0x8c] sm:$0xf]
        %v1882 = vld [vmem:[%s585 + $0x90] sm:$0xf]
        %v1883 = vld [vmem:[%s585 + $0x94] sm:$0xf]
        %v1884 = vld [vmem:[%s585 + $0x98] sm:$0xf]
        %v1885 = vld [vmem:[%s585 + $0x9c] sm:$0xf]
        %v1886 = vld [vmem:[%s585 + $0xa0] sm:$0xf]
        %v1887 = vld [vmem:[%s585 + $0xa4] sm:$0xf]
        %v1888 = vld [vmem:[%s585 + $0xa8] sm:$0xf]
        %v1889 = vld [vmem:[%s585 + $0xac] sm:$0xf]
        %v1890 = vld [vmem:[%s585 + $0xb0] sm:$0xf]
        %v1891 = vld [vmem:[%s585 + $0xb4] sm:$0xf]
        %v1892 = vld [vmem:[%s585 + $0xb8] sm:$0xf]
        %v1893 = vld [vmem:[%s585 + $0xbc] sm:$0xf]
        %v1894 = vld [vmem:[%s585 + $0xc0] sm:$0xf]
        %v1895 = vld [vmem:[%s585 + $0xc4] sm:$0xf]
        %v1896 = vld [vmem:[%s585 + $0xc8] sm:$0xf]
        %v1897 = vld [vmem:[%s585 + $0xcc] sm:$0xf]
        %v1898 = vld [vmem:[%s585 + $0xd0] sm:$0xf]
        %v1899 = vld [vmem:[%s585 + $0xd4] sm:$0xf]
        %v1900 = vld [vmem:[%s585 + $0xd8] sm:$0xf]
        %v1901 = vld [vmem:[%s585 + $0xdc] sm:$0xf]
        %v1902 = vld [vmem:[%s585 + $0xe0] sm:$0xf]
        %v1903 = vld [vmem:[%s585 + $0xe4] sm:$0xf]
        %v1904 = vld [vmem:[%s585 + $0xe8] sm:$0xf]
        %v1905 = vld [vmem:[%s585 + $0xec] sm:$0xf]
        %v1906 = vld [vmem:[%s585 + $0xf0] sm:$0xf]
        %v1907 = vld [vmem:[%s585 + $0xf4] sm:$0xf]
        %v1908 = vld [vmem:[%s585 + $0xf8] sm:$0xf]
        %v1909 = vld [vmem:[%s585 + $0xfc] sm:$0xf]
        %v1974 = vunpack.c.l.b16 %v1846
        %v1975 = vunpack.c.l.b16 %v1847
        %v1976 = vunpack.c.l.b16 %v1848
        %v1977 = vunpack.c.l.b16 %v1849
        %v1978 = vunpack.c.l.b16 %v1850
        %v1979 = vunpack.c.l.b16 %v1851
        %v1980 = vunpack.c.l.b16 %v1852
        %v1981 = vunpack.c.l.b16 %v1853
        %v1982 = vunpack.c.l.b16 %v1854
        %v1983 = vunpack.c.l.b16 %v1855
        %v1984 = vunpack.c.l.b16 %v1856
        %v1985 = vunpack.c.l.b16 %v1857
        %v1986 = vunpack.c.l.b16 %v1858
        %v1987 = vunpack.c.l.b16 %v1859
        %v1988 = vunpack.c.l.b16 %v1860
        %v1989 = vunpack.c.l.b16 %v1861
        %v1990 = vunpack.c.l.b16 %v1862
        %v1991 = vunpack.c.l.b16 %v1863
        %v1992 = vunpack.c.l.b16 %v1864
        %v1993 = vunpack.c.l.b16 %v1865
        %v1994 = vunpack.c.l.b16 %v1866
        %v1995 = vunpack.c.l.b16 %v1867
        %v1996 = vunpack.c.l.b16 %v1868
        %v1997 = vunpack.c.l.b16 %v1869
        %v1998 = vunpack.c.l.b16 %v1870
        %v1999 = vunpack.c.l.b16 %v1871
        %v2000 = vunpack.c.l.b16 %v1872
        %v2001 = vunpack.c.l.b16 %v1873
        %v2002 = vunpack.c.l.b16 %v1874
        %v2003 = vunpack.c.l.b16 %v1875
        %v2004 = vunpack.c.l.b16 %v1876
        %v2005 = vunpack.c.l.b16 %v1877
        %v2006 = vunpack.c.l.b16 %v1878
        %v2007 = vunpack.c.l.b16 %v1879
        %v2008 = vunpack.c.l.b16 %v1880
        %v2009 = vunpack.c.l.b16 %v1881
        %v2010 = vunpack.c.l.b16 %v1882
        %v2011 = vunpack.c.l.b16 %v1883
        %v2012 = vunpack.c.l.b16 %v1884
        %v2013 = vunpack.c.l.b16 %v1885
        %v2014 = vunpack.c.l.b16 %v1886
        %v2015 = vunpack.c.l.b16 %v1887
        %v2016 = vunpack.c.l.b16 %v1888
        %v2017 = vunpack.c.l.b16 %v1889
        %v2018 = vunpack.c.l.b16 %v1890
        %v2019 = vunpack.c.l.b16 %v1891
        %v2020 = vunpack.c.l.b16 %v1892
        %v2021 = vunpack.c.l.b16 %v1893
        %v2022 = vunpack.c.l.b16 %v1894
        %v2023 = vunpack.c.l.b16 %v1895
        %v2024 = vunpack.c.l.b16 %v1896
        %v2025 = vunpack.c.l.b16 %v1897
        %v2026 = vunpack.c.l.b16 %v1898
        %v2027 = vunpack.c.l.b16 %v1899
        %v2028 = vunpack.c.l.b16 %v1900
        %v2029 = vunpack.c.l.b16 %v1901
        %v2030 = vunpack.c.l.b16 %v1902
        %v2031 = vunpack.c.l.b16 %v1903
        %v2032 = vunpack.c.l.b16 %v1904
        %v2033 = vunpack.c.l.b16 %v1905
        %v2034 = vunpack.c.l.b16 %v1906
        %v2035 = vunpack.c.l.b16 %v1907
        %v2036 = vunpack.c.l.b16 %v1908
        %v2037 = vunpack.c.l.b16 %v1909
        %v2038 = vpack.c.b16 %v1975, %v1974
        %v2039 = vpack.c.b16 %v1977, %v1976
        %v2040 = vpack.c.b16 %v1979, %v1978
        %v2041 = vpack.c.b16 %v1981, %v1980
        %v2042 = vpack.c.b16 %v1983, %v1982
        %v2043 = vpack.c.b16 %v1985, %v1984
        %v2044 = vpack.c.b16 %v1987, %v1986
        %v2045 = vpack.c.b16 %v1989, %v1988
        %v2046 = vpack.c.b16 %v1991, %v1990
        %v2047 = vpack.c.b16 %v1993, %v1992
        %v2048 = vpack.c.b16 %v1995, %v1994
        %v2049 = vpack.c.b16 %v1997, %v1996
        %v2050 = vpack.c.b16 %v1999, %v1998
        %v2051 = vpack.c.b16 %v2001, %v2000
        %v2052 = vpack.c.b16 %v2003, %v2002
        %v2053 = vpack.c.b16 %v2005, %v2004
        %v2054 = vpack.c.b16 %v2007, %v2006
        %v2055 = vpack.c.b16 %v2009, %v2008
        %v2056 = vpack.c.b16 %v2011, %v2010
        %v2057 = vpack.c.b16 %v2013, %v2012
        %v2058 = vpack.c.b16 %v2015, %v2014
        %v2059 = vpack.c.b16 %v2017, %v2016
        %v2060 = vpack.c.b16 %v2019, %v2018
        %v2061 = vpack.c.b16 %v2021, %v2020
        %v2062 = vpack.c.b16 %v2023, %v2022
        %v2063 = vpack.c.b16 %v2025, %v2024
        %v2064 = vpack.c.b16 %v2027, %v2026
        %v2065 = vpack.c.b16 %v2029, %v2028
        %v2066 = vpack.c.b16 %v2031, %v2030
        %v2067 = vpack.c.b16 %v2033, %v2032
        %v2068 = vpack.c.b16 %v2035, %v2034
        %v2069 = vpack.c.b16 %v2037, %v2036
        %2102 = vmatpush.bf16.msra.mxu0 %v2045
        %2103 = vmatpush.bf16.msra.mxu0 %v2044
        %2104 = vmatpush.bf16.msra.mxu0 %v2043
        %2105 = vmatpush.bf16.msra.mxu0 %v2042
        %2106 = vmatpush.bf16.msra.mxu0 %v2041
        %2107 = vmatpush.bf16.msra.mxu0 %v2040
        %2108 = vmatpush.bf16.msra.mxu0 %v2039
        %2109 = vmatpush.bf16.msra.mxu0 %v2038
        %2110 = vmatmul.bf16.gmra.mxu0 %v1842
        %v2111 = vpop.f32.mrf.mxu0
        %v2112 = vadd.f32 %v704, %v2111
        %v2113 = vpop.f32.mrf.mxu0
        %v2114 = vadd.f32 %v705, %v2113
        %2115 = vdwg.mxu0
        %2116 = vmatpush.bf16.msra.mxu0 %v2053
        %2117 = vmatpush.bf16.msra.mxu0 %v2052
        %2118 = vmatpush.bf16.msra.mxu0 %v2051
        %2119 = vmatpush.bf16.msra.mxu0 %v2050
        %2120 = vmatpush.bf16.msra.mxu0 %v2049
        %2121 = vmatpush.bf16.msra.mxu0 %v2048
        %2122 = vmatpush.bf16.msra.mxu0 %v2047
        %2123 = vmatpush.bf16.msra.mxu0 %v2046
        %2124 = vmatmul.bf16.gmra.mxu0 %v1843
        %v2125 = vpop.f32.mrf.mxu0
        %v2126 = vadd.f32 %v2112, %v2125
        %v2127 = vpop.f32.mrf.mxu0
        %v2128 = vadd.f32 %v2114, %v2127
        %2129 = vdwg.mxu0
        %2130 = vmatpush.bf16.msra.mxu0 %v2061
        %2131 = vmatpush.bf16.msra.mxu0 %v2060
        %2132 = vmatpush.bf16.msra.mxu0 %v2059
        %2133 = vmatpush.bf16.msra.mxu0 %v2058
        %2134 = vmatpush.bf16.msra.mxu0 %v2057
        %2135 = vmatpush.bf16.msra.mxu0 %v2056
        %2136 = vmatpush.bf16.msra.mxu0 %v2055
        %2137 = vmatpush.bf16.msra.mxu0 %v2054
        %2138 = vmatmul.bf16.gmra.mxu0 %v1844
        %v2139 = vpop.f32.mrf.mxu0
        %v2140 = vadd.f32 %v2126, %v2139
        %v2141 = vpop.f32.mrf.mxu0
        %v2142 = vadd.f32 %v2128, %v2141
        %2143 = vdwg.mxu0
        %2144 = vmatpush.bf16.msra.mxu0 %v2069
        %2145 = vmatpush.bf16.msra.mxu0 %v2068
        %2146 = vmatpush.bf16.msra.mxu0 %v2067
        %2147 = vmatpush.bf16.msra.mxu0 %v2066
        %2148 = vmatpush.bf16.msra.mxu0 %v2065
        %2149 = vmatpush.bf16.msra.mxu0 %v2064
        %2150 = vmatpush.bf16.msra.mxu0 %v2063
        %2151 = vmatpush.bf16.msra.mxu0 %v2062
        %2152 = vmatmul.bf16.gmra.mxu0 %v1845
        %v2153 = vpop.f32.mrf.mxu0
        %v2154 = vadd.f32 %v2140, %v2153
        %v2155 = vpop.f32.mrf.mxu0
        %v2156 = vadd.f32 %v2142, %v2155
        %2157 = vdwg.mxu0
        %v2158 = vld [vmem:[%s669] sm:$0x1]
        %v2159 = vld [vmem:[%s672] sm:$0x1]
        %2160 = vadd.xlane.f32.xlu0 %v2154
        %v2161 = vpop.xlane.xlu0 %2160
        %2162 = vadd.xlane.f32.xlu0 %v2156
        %v2163 = vpop.xlane.xlu0 %2162
        %v2164 = vmul.f32 %v2161, 0.03125
        %v2165 = vmul.f32 %v2163, 0.03125
        %v2166 = vsub.f32 %v2154, %v2164
        %v2167 = vsub.f32 %v2156, %v2165
        %v2168 = vmul.f32 %v2166, %v710
        %v2169 = vmul.f32 %v2167, %v710
        %v2170 = vmul.f32 %v2168, %v2168
        %v2171 = vmul.f32 %v2169, %v2169
        %2172 = vadd.xlane.f32.xlu0 %v2170
        %v2173 = vpop.xlane.xlu0 %2172
        %2174 = vadd.xlane.f32.xlu0 %v2171
        %v2175 = vpop.xlane.xlu0 %2174
        %v2176 = vmul.f32 %v2173, 0.03125
        %v2177 = vmul.f32 %v2175, 0.03125
        %v2178 = vadd.f32 %v2176, 1e-05
        %v2179 = vadd.f32 %v2177, 1e-05
        %v2180 = vrsqrt.pop %v2178
        %v2181 = vmul.f32 %v2180, %v2178
        %v2182 = vmul.f32 %v2181, %v2180
        %v2183 = vmul.f32 0.5, %v2182
        %v2184 = vsub.f32 1.5, %v2183
        %v2185 = vmul.f32 %v2180, %v2184
        %vm2186 = vweird.f32 %v2178
        %vm2187 = vweird.f32 %v2180
        %vm2188 = vmor %vm2186, %vm2187
        %v2189 = vsel %vm2188, %v2180, %v2185
        %v2190 = vrsqrt.pop %v2179
        %v2191 = vmul.f32 %v2190, %v2179
        %v2192 = vmul.f32 %v2191, %v2190
        %v2193 = vmul.f32 0.5, %v2192
        %v2194 = vsub.f32 1.5, %v2193
        %v2195 = vmul.f32 %v2190, %v2194
        %vm2196 = vweird.f32 %v2179
        %vm2197 = vweird.f32 %v2190
        %vm2198 = vmor %vm2196, %vm2197
        %v2199 = vsel %vm2198, %v2190, %v2195
        %v2200 = vmul.f32 %v2168, %v2189
        %v2201 = vmul.f32 %v2169, %v2199
        %v2203 = vperm.slane %v2158, 0
        %v2205 = vmul.f32 %v2200, %v2203
        %v2206 = vmul.f32 %v2201, %v2203
        %v2208 = vperm.slane %v2159, 0
        %v2210 = vadd.f32 %v2205, %v2208
        %v2211 = vadd.f32 %v2206, %v2208
        %v2212 = vpack.c.bf16 %v2211, %v2210
        %v2213 = vld [vmem:[%s677] sm:$0xf]
        %v2214 = vld [vmem:[%s677 + $0x4] sm:$0xf]
        %v2215 = vld [vmem:[%s677 + $0x8] sm:$0xf]
        %v2216 = vld [vmem:[%s677 + $0xc] sm:$0xf]
        %v2217 = vld [vmem:[%s677 + $0x10] sm:$0xf]
        %v2218 = vld [vmem:[%s677 + $0x14] sm:$0xf]
        %v2219 = vld [vmem:[%s677 + $0x18] sm:$0xf]
        %v2220 = vld [vmem:[%s677 + $0x1c] sm:$0xf]
        %v2221 = vld [vmem:[%s677 + $0x20] sm:$0xf]
        %v2222 = vld [vmem:[%s677 + $0x24] sm:$0xf]
        %v2223 = vld [vmem:[%s677 + $0x28] sm:$0xf]
        %v2224 = vld [vmem:[%s677 + $0x2c] sm:$0xf]
        %v2225 = vld [vmem:[%s677 + $0x30] sm:$0xf]
        %v2226 = vld [vmem:[%s677 + $0x34] sm:$0xf]
        %v2227 = vld [vmem:[%s677 + $0x38] sm:$0xf]
        %v2228 = vld [vmem:[%s677 + $0x3c] sm:$0xf]
        %v2229 = vld [vmem:[%s680] sm:$0x1]
        %v2231 = vperm.slane %v2229, 0
        %v2249 = vunpack.c.l.b16 %v2213
        %v2250 = vunpack.c.l.b16 %v2214
        %v2251 = vunpack.c.l.b16 %v2215
        %v2252 = vunpack.c.l.b16 %v2216
        %v2253 = vunpack.c.l.b16 %v2217
        %v2254 = vunpack.c.l.b16 %v2218
        %v2255 = vunpack.c.l.b16 %v2219
        %v2256 = vunpack.c.l.b16 %v2220
        %v2257 = vunpack.c.l.b16 %v2221
        %v2258 = vunpack.c.l.b16 %v2222
        %v2259 = vunpack.c.l.b16 %v2223
        %v2260 = vunpack.c.l.b16 %v2224
        %v2261 = vunpack.c.l.b16 %v2225
        %v2262 = vunpack.c.l.b16 %v2226
        %v2263 = vunpack.c.l.b16 %v2227
        %v2264 = vunpack.c.l.b16 %v2228
        %v2265 = vpack.c.b16 %v2250, %v2249
        %v2266 = vpack.c.b16 %v2252, %v2251
        %v2267 = vpack.c.b16 %v2254, %v2253
        %v2268 = vpack.c.b16 %v2256, %v2255
        %v2269 = vpack.c.b16 %v2258, %v2257
        %v2270 = vpack.c.b16 %v2260, %v2259
        %v2271 = vpack.c.b16 %v2262, %v2261
        %v2272 = vpack.c.b16 %v2264, %v2263
        %2281 = vmatpush.bf16.msra.mxu0 %v2272
        %2282 = vmatpush.bf16.msra.mxu0 %v2271
        %2283 = vmatpush.bf16.msra.mxu0 %v2270
        %2284 = vmatpush.bf16.msra.mxu0 %v2269
        %2285 = vmatpush.bf16.msra.mxu0 %v2268
        %2286 = vmatpush.bf16.msra.mxu0 %v2267
        %2287 = vmatpush.bf16.msra.mxu0 %v2266
        %2288 = vmatpush.bf16.msra.mxu0 %v2265
        %2289 = vmatmul.bf16.gmra.mxu0 %v2212
        %v2290 = vpop.f32.mrf.mxu0
        %v2291 = vadd.f32 %v2231, %v2290
        %v2292 = vpop.f32.mrf.mxu0
        %v2293 = vadd.f32 %v2231, %v2292
        %2294 = vdwg.mxu0
        %v2295 = vmax.f32 %v2291, 0.0
        %v2296 = vmax.f32 %v2293, 0.0
        %v2297 = vpack.c.bf16 %v2296, %v2295
        %v2298 = vld [vmem:[%s685] sm:$0xf]
        %v2299 = vld [vmem:[%s685 + $0x4] sm:$0xf]
        %v2300 = vld [vmem:[%s685 + $0x8] sm:$0xf]
        %v2301 = vld [vmem:[%s685 + $0xc] sm:$0xf]
        %v2302 = vld [vmem:[%s685 + $0x10] sm:$0xf]
        %v2303 = vld [vmem:[%s685 + $0x14] sm:$0xf]
        %v2304 = vld [vmem:[%s685 + $0x18] sm:$0xf]
        %v2305 = vld [vmem:[%s685 + $0x1c] sm:$0xf]
        %v2306 = vld [vmem:[%s685 + $0x20] sm:$0xf]
        %v2307 = vld [vmem:[%s685 + $0x24] sm:$0xf]
        %v2308 = vld [vmem:[%s685 + $0x28] sm:$0xf]
        %v2309 = vld [vmem:[%s685 + $0x2c] sm:$0xf]
        %v2310 = vld [vmem:[%s685 + $0x30] sm:$0xf]
        %v2311 = vld [vmem:[%s685 + $0x34] sm:$0xf]
        %v2312 = vld [vmem:[%s685 + $0x38] sm:$0xf]
        %v2313 = vld [vmem:[%s685 + $0x3c] sm:$0xf]
        %v2314 = vld [vmem:[%s688] sm:$0x1]
        %v2316 = vperm.slane %v2314, 0
        %v2334 = vunpack.c.l.b16 %v2298
        %v2335 = vunpack.c.l.b16 %v2299
        %v2336 = vunpack.c.l.b16 %v2300
        %v2337 = vunpack.c.l.b16 %v2301
        %v2338 = vunpack.c.l.b16 %v2302
        %v2339 = vunpack.c.l.b16 %v2303
        %v2340 = vunpack.c.l.b16 %v2304
        %v2341 = vunpack.c.l.b16 %v2305
        %v2342 = vunpack.c.l.b16 %v2306
        %v2343 = vunpack.c.l.b16 %v2307
        %v2344 = vunpack.c.l.b16 %v2308
        %v2345 = vunpack.c.l.b16 %v2309
        %v2346 = vunpack.c.l.b16 %v2310
        %v2347 = vunpack.c.l.b16 %v2311
        %v2348 = vunpack.c.l.b16 %v2312
        %v2349 = vunpack.c.l.b16 %v2313
        %v2350 = vpack.c.b16 %v2335, %v2334
        %v2351 = vpack.c.b16 %v2337, %v2336
        %v2352 = vpack.c.b16 %v2339, %v2338
        %v2353 = vpack.c.b16 %v2341, %v2340
        %v2354 = vpack.c.b16 %v2343, %v2342
        %v2355 = vpack.c.b16 %v2345, %v2344
        %v2356 = vpack.c.b16 %v2347, %v2346
        %v2357 = vpack.c.b16 %v2349, %v2348
        %2366 = vmatpush.bf16.msra.mxu0 %v2357
        %2367 = vmatpush.bf16.msra.mxu0 %v2356
        %2368 = vmatpush.bf16.msra.mxu0 %v2355
        %2369 = vmatpush.bf16.msra.mxu0 %v2354
        %2370 = vmatpush.bf16.msra.mxu0 %v2353
        %2371 = vmatpush.bf16.msra.mxu0 %v2352
        %2372 = vmatpush.bf16.msra.mxu0 %v2351
        %2373 = vmatpush.bf16.msra.mxu0 %v2350
        %2374 = vmatmul.bf16.gmra.mxu0 %v2297
        %v2375 = vpop.f32.mrf.mxu0
        %v2376 = vadd.f32 %v2316, %v2375
        %v2377 = vpop.f32.mrf.mxu0
        %v2378 = vadd.f32 %v2316, %v2377
        %2379 = vdwg.mxu0
        %v2380 = vadd.f32 %v2376, %v2210
        %v2381 = vadd.f32 %v2378, %v2211
        %v2382 = vld [vmem:[%s691] sm:$0x1]
        %v2383 = vld [vmem:[%s694] sm:$0x1]
        %2384 = vadd.xlane.f32.xlu0 %v2380
        %v2385 = vpop.xlane.xlu0 %2384
        %2386 = vadd.xlane.f32.xlu0 %v2381
        %v2387 = vpop.xlane.xlu0 %2386
        %v2388 = vmul.f32 %v2385, 0.03125
        %v2389 = vmul.f32 %v2387, 0.03125
        %v2390 = vsub.f32 %v2380, %v2388
        %v2391 = vsub.f32 %v2381, %v2389
        %v2392 = vmul.f32 %v2390, %v710
        %v2393 = vmul.f32 %v2391, %v710
        %v2394 = vmul.f32 %v2392, %v2392
        %v2395 = vmul.f32 %v2393, %v2393
        %2396 = vadd.xlane.f32.xlu0 %v2394
        %v2397 = vpop.xlane.xlu0 %2396
        %2398 = vadd.xlane.f32.xlu0 %v2395
        %v2399 = vpop.xlane.xlu0 %2398
        %v2400 = vmul.f32 %v2397, 0.03125
        %v2401 = vmul.f32 %v2399, 0.03125
        %v2402 = vadd.f32 %v2400, 1e-05
        %v2403 = vadd.f32 %v2401, 1e-05
        %v2404 = vrsqrt.pop %v2402
        %v2405 = vmul.f32 %v2404, %v2402
        %v2406 = vmul.f32 %v2405, %v2404
        %v2407 = vmul.f32 0.5, %v2406
        %v2408 = vsub.f32 1.5, %v2407
        %v2409 = vmul.f32 %v2404, %v2408
        %vm2410 = vweird.f32 %v2402
        %vm2411 = vweird.f32 %v2404
        %vm2412 = vmor %vm2410, %vm2411
        %v2413 = vsel %vm2412, %v2404, %v2409
        %v2414 = vrsqrt.pop %v2403
        %v2415 = vmul.f32 %v2414, %v2403
        %v2416 = vmul.f32 %v2415, %v2414
        %v2417 = vmul.f32 0.5, %v2416
        %v2418 = vsub.f32 1.5, %v2417
        %v2419 = vmul.f32 %v2414, %v2418
        %vm2420 = vweird.f32 %v2403
        %vm2421 = vweird.f32 %v2414
        %vm2422 = vmor %vm2420, %vm2421
        %v2423 = vsel %vm2422, %v2414, %v2419
        %v2424 = vmul.f32 %v2392, %v2413
        %v2425 = vmul.f32 %v2393, %v2423
        %v2427 = vperm.slane %v2382, 0
        %v2429 = vmul.f32 %v2424, %v2427
        %v2430 = vmul.f32 %v2425, %v2427
        %v2432 = vperm.slane %v2383, 0
        %v2434 = vadd.f32 %v2429, %v2432
        %v2435 = vadd.f32 %v2430, %v2432
        %2436 = vst [vmem:[#allocation2] sm:$0xff] %v2434
        %2437 = vst [vmem:[#allocation2 + $0x8] sm:$0xff] %v2435
        %p2438 = scmp.eq.s32.totalorder %s33, 1
        // Predicated region
        $region93: #{transformer_apply.2} parent=71 // pred_check
          %p2439 = pneg %p2438
        $region94: #{transformer_apply.2} parent=71 // pred_check_branch
          %2441 = sbr.rel (%p2439) target = $region96
        $region95: #{transformer_apply.2} parent=71 // pred_region
          %2442 = vst [vmem:[%s13] sm:$0xff] %v2434
          %2443 = vst [vmem:[%s13 + $0x8] sm:$0xff] %v2435
        $region96: #{transformer_apply.2} parent=71 // pred_fallthru
          _
        // Predicated region
        $region97: #{transformer_apply.2} parent=71 // pred_check
          %p2444 = pneg %p379
        $region98: #{transformer_apply.2} parent=71 // pred_check_branch
          %2446 = sbr.rel (%p2444) target = $region100
        $region99: #{transformer_apply.2} parent=71 // pred_region
          _
        $region100: #{transformer_apply.2} parent=71 // pred_fallthru
          _
        // Predicated region
        $region101: #{transformer_apply.2} parent=71 // pred_check
          %p2447 = pneg %p379
        $region102: #{transformer_apply.2} parent=71 // pred_check_branch
          %2449 = sbr.rel (%p2447) target = $region104
        $region103: #{transformer_apply.2} parent=71 // pred_region
          _
        $region104: #{transformer_apply.2} parent=71 // pred_fallthru
          _
      $region72: #{transformer_apply.2} parent=5 // pred_fallthru
        _
      %p2450 = scmp.le.s32.totalorder 2, %s28
      // Predicated region
      $region105: #{transformer_apply.2} parent=5 // pred_check
        %p2451 = pneg %p2450
      $region106: #{transformer_apply.2} parent=5 // pred_check_branch
        %2453 = sbr.rel (%p2451) target = $region108
      $region107: #{transformer_apply.2} parent=5 // pred_region
        %s2454 = ssub.s32 %s28, 2
      $region108: #{transformer_apply.2} parent=5 // pred_fallthru
        _
    $region6: #{transformer_apply.2} parent=1 // loop_footer
      %s32 = sadd.s32 1, %s28
    $region7: #{transformer_apply.2} parent=1 // loop_footer_branch
      %27 = sbr.rel target = $region3
    $region8: #{transformer_apply.2} parent=1 // loop_exit
      _
    %2455 = vsyncpa [#allocation4], 1
    %s2456 = scalar_lea.sflag [#allocation4], 1
    %2457 = vsyncpa %s2456, 1
    %2458 = vsyncpa [#allocation6], 1
    %s2459 = scalar_lea.sflag [#allocation6], 1
    %2460 = vsyncpa %s2459, 1
    %2461 = vsyncpa [#allocation9], 1
    %s2462 = scalar_lea.sflag [#allocation9], 1
    %2463 = vsyncpa %s2462, 1

</llo_original>
